<compile_context>
chip_gen: v5e
topology: v5e:2x2
jax: 0.10.0
libtpu: 0.0.40
codegen_flags: <defaults>
</compile_context>

<pallas_src>
import functools
import math

import jax
import jax.numpy as jnp
from jax.experimental import pallas as pl
from jax.experimental.pallas import tpu as pltpu

LN_EPS = 1e-5
HI = jax.lax.Precision.HIGHEST        # reference only

# Groups (= batch*ts_d attention rows) handled per grid step.  Sized so the
# per-step working set stays well under the VMEM limit below; sweep upward on
# v5e/v6e (128 MiB VMEM) if the kernel turns out DMA-exposed.
BTS_TILE = 256
VMEM_LIMIT_BYTES = 48 * 1024 * 1024   # headroom under v7x's 64 MiB physical VMEM


# --------------------------- exact GELU (erf) -------------------------------
# Abramowitz & Stegun 7.1.26 rational approximation of erf, |err| <= 1.5e-7:
# matches PyTorch nn.GELU() (exact erf form) to float32 noise.
_ERF_P = 0.3275911
_ERF_A1, _ERF_A2, _ERF_A3, _ERF_A4, _ERF_A5 = (
    0.254829592, -0.284496736, 1.421413741, -1.453152027, 1.061405429)


def _erf(x):
    sgn = jnp.where(x >= 0.0, 1.0, -1.0)
    a = jnp.abs(x)
    t = 1.0 / (1.0 + _ERF_P * a)
    poly = t * (_ERF_A1 + t * (_ERF_A2 + t * (_ERF_A3 + t * (_ERF_A4 + t * _ERF_A5))))
    return sgn * (1.0 - poly * jnp.exp(-a * a))


def _gelu_exact(x):
    return 0.5 * x * (1.0 + _erf(x * (1.0 / math.sqrt(2.0))))


# --------------------------- fused decoder kernel ---------------------------
def _decoder_layer_kernel(
        x_ref, c_ref,
        wq_ref, bq_ref, wkv_ref, bkv_ref, wo_ref, bo_ref,
        g1_ref, be1_ref,
        a_ref, w1_ref, b1_ref, w2_ref, b2_ref, g2_ref, be2_ref, wp_ref, bp_ref,
        dec_ref, pred_ref,
        pack_ref,
        *, P):
    f32 = jnp.float32
    x = x_ref[...].astype(f32)                     # (T, Sq, D)
    c = c_ref[...].astype(f32)                     # (T, Sk, D)
    T, Sq, D = x.shape
    Sk = c.shape[1]

    xf = x.reshape(T * Sq, D)                      # leading-dim merges (layout-free)
    cf = c.reshape(T * Sk, D)

    # ---- cross-attention; DEFAULT precision = single bf16 MXU pass ----------
    q = jnp.dot(xf, wq_ref[...], preferred_element_type=f32) + bq_ref[...]
    kv = jnp.dot(cf, wkv_ref[...], preferred_element_type=f32) + bkv_ref[...]
    k = kv[:, :D]
    v = kv[:, D:]

    q3 = q.reshape(T, Sq, D)
    k3 = k.reshape(T, Sk, D)
    v3 = v.reshape(T, Sk, D)

    s = jnp.einsum('bqd,bkd->bqk', q3, k3, preferred_element_type=f32)
    s = s - jnp.max(s, axis=-1, keepdims=True)     # scale already folded into wq/bq
    attn = jnp.exp(s)
    attn = attn * pl.reciprocal(jnp.sum(attn, axis=-1, keepdims=True), approx=True)
    o = jnp.einsum('bqk,bkd->bqd', attn, v3, preferred_element_type=f32)
    o2 = jnp.dot(o.reshape(T * Sq, D), wo_ref[...],
                 preferred_element_type=f32) + bo_ref[...]

    xr = xf + o2                                   # residual; dropout = identity (eval)

    # ---- norm1: exact f32 statistics on VPU/XLU (reduce over D lanes) -------
    mu = jnp.mean(xr, axis=-1, keepdims=True)
    xc = xr - mu
    var = jnp.mean(xc * xc, axis=-1, keepdims=True)
    x1 = xc * jax.lax.rsqrt(var + LN_EPS) * g1_ref[...] + be1_ref[...]

    # ---- pack P consecutive rows into the 128-lane dim ----------------------
    # (VMEM scratch + strided ref reads + lane concat: avoids minor-dim reshape)
    if P == 1:
        x1p = x1
    else:
        rp = (T * Sq) // P
        pack_ref[...] = x1
        x1p = jnp.concatenate(
            [pack_ref[pl.ds(i, rp, P), :] for i in range(P)], axis=-1)  # (rp, P*D)

    # ---- MLP1 with block-diagonal packed weights ----------------------------
    h = jnp.dot(x1p, w1_ref[...], preferred_element_type=f32) + b1_ref[...]
    h = _gelu_exact(h)
    y = jnp.dot(h, w2_ref[...], preferred_element_type=f32) + b2_ref[...]

    # ---- norm2 over each D-wide lane group ----------------------------------
    z = x1p + y
    if P == 1:
        mu2 = jnp.mean(z, axis=-1, keepdims=True)
        zc = z - mu2
        var2 = jnp.mean(zc * zc, axis=-1, keepdims=True)
    else:
        a = a_ref[...]     # kron(I_P, 1/D): entries exactly representable in bf16
        mu2 = jnp.dot(z, a, preferred_element_type=f32)
        zc = z - mu2
        var2 = jnp.dot(zc * zc, a, preferred_element_type=f32)
    dec = zc * jax.lax.rsqrt(var2 + LN_EPS) * g2_ref[...] + be2_ref[...]
    dec_ref[...] = dec.astype(dec_ref.dtype)       # full-128-lane (unmasked) store

    # ---- linear_pred (packed block-diagonal weight -> lane-dense store) -----
    pred = jnp.dot(dec, wp_ref[...], preferred_element_type=f32) + bp_ref[...]
    pred_ref[...] = pred.astype(pred_ref.dtype)


# ------------------------------ wrapper glue ---------------------------------
def _pack_params(p, d_model, P):
    f32 = jnp.float32
    row = lambda v: v.reshape(1, -1).astype(f32)
    scale = 1.0 / math.sqrt(d_model)
    eye = jnp.eye(P, dtype=f32)
    bd = lambda w: jnp.kron(eye, w.astype(f32))               # block-diagonal packing
    tile = lambda v: jnp.tile(v.reshape(1, -1).astype(f32), (1, P))
    a = jnp.kron(eye, jnp.full((d_model, d_model), 1.0 / d_model, f32))
    return dict(
        wq=(p['wq'] * scale).astype(f32), bq=row(p['bq'] * scale),
        wkv=jnp.concatenate([p['wk'], p['wv']], axis=1).astype(f32),
        bkv=row(jnp.concatenate([p['bk'], p['bv']])),
        wo=p['wo'].astype(f32), bo=row(p['bo']),
        g1=row(p['ln1_g']), be1=row(p['ln1_b']),
        a=a,
        w1=bd(p['mlp_w1']), b1=tile(p['mlp_b1']),
        w2=bd(p['mlp_w2']), b2=tile(p['mlp_b2']),
        g2=tile(p['ln2_g']), be2=tile(p['ln2_b']),
        wp=bd(p['pred_w']), bp=tile(p['pred_b']),
    )


def _choose_group_tile(bts, sq, P):
    # >= 2 grid steps whenever possible (shards across both v7x TensorCores)
    # and packed output-block rows a multiple of 8 for inner (non-final) tiles.
    m = (8 * P) // math.gcd(sq, 8 * P)
    desired = min(BTS_TILE, max(1, -(-bts // 2)))
    tb = max(m, (desired // m) * m)
    return min(tb, bts)


def decoder_layer_forward(x, cross, params):
    """DecoderLayer.forward (inference): returns (dec_output, layer_predict)."""
    b, ts_d, out_seg, d = x.shape
    in_seg = cross.shape[2]
    seg_len = params['pred_w'].shape[1]
    bts = b * ts_d

    # lane-packing factor: P original rows per 128-lane packed row.
    P = 128 // d if (d <= 128 and 128 % d == 0 and out_seg % (128 // d) == 0) else 1
    pp = _pack_params(params, d, P)

    # x = self.self_attention(x) -> identity (see TODO at top of file)
    x3 = x.reshape(bts, out_seg, d)
    c3 = cross.reshape(bts, in_seg, d)

    tb = _choose_group_tile(bts, out_seg, P)
    grid = pl.cdiv(bts, tb)
    rp_total = (bts * out_seg) // P
    rp_blk = (tb * out_seg) // P
    wd = P * d
    wpo = P * seg_len

    full = lambda shape: pl.BlockSpec(shape, lambda i, _n=len(shape): (0,) * _n)

    dec_pk, pred_pk = pl.pallas_call(
        functools.partial(_decoder_layer_kernel, P=P),
        out_shape=(jax.ShapeDtypeStruct((rp_total, wd), x.dtype),
                   jax.ShapeDtypeStruct((rp_total, wpo), x.dtype)),
        grid=(grid,),
        in_specs=[
            pl.BlockSpec((tb, out_seg, d), lambda i: (i, 0, 0)),   # x
            pl.BlockSpec((tb, in_seg, d), lambda i: (i, 0, 0)),    # cross
            full((d, d)), full((1, d)),          # wq (scale folded), bq
            full((d, 2 * d)), full((1, 2 * d)),  # wkv (merged K|V), bkv
            full((d, d)), full((1, d)),          # wo, bo
            full((1, d)), full((1, d)),          # gamma1, beta1
            full((wd, wd)),                      # A (norm2 block averaging)
            full((wd, wd)), full((1, wd)),       # W1 (block-diag), b1
            full((wd, wd)), full((1, wd)),       # W2 (block-diag), b2
            full((1, wd)), full((1, wd)),        # gamma2, beta2
            full((wd, wpo)), full((1, wpo)),     # Wpred (block-diag), bpred
        ],
        out_specs=(pl.BlockSpec((rp_blk, wd), lambda i: (i, 0)),
                   pl.BlockSpec((rp_blk, wpo), lambda i: (i, 0))),
        scratch_shapes=[pltpu.VMEM((tb * out_seg, d), jnp.float32)],
        compiler_params=pltpu.CompilerParams(
            dimension_semantics=("parallel",),
            vmem_limit_bytes=VMEM_LIMIT_BYTES),
    )(x3, c3,
      pp['wq'], pp['bq'], pp['wkv'], pp['bkv'], pp['wo'], pp['bo'],
      pp['g1'], pp['be1'],
      pp['a'], pp['w1'], pp['b1'], pp['w2'], pp['b2'],
      pp['g2'], pp['be2'], pp['wp'], pp['bp'])

    # free row-major views back to the module's output shapes
    dec_output = dec_pk.reshape(b, ts_d, out_seg, d)
    layer_predict = pred_pk.reshape(b, ts_d * out_seg, seg_len)
    return dec_output, layer_predict


def init_params(key, d_model, seg_len):
    ks = jax.random.split(key, 12)
    u = lambda k, shape, fan: jax.random.uniform(
        k, shape, jnp.float32, -1.0 / math.sqrt(fan), 1.0 / math.sqrt(fan))
    return dict(
        # assumed standard single-head attention projections (see TODO)
        wq=u(ks[0], (d_model, d_model), d_model), bq=u(ks[1], (d_model,), d_model),
        wk=u(ks[2], (d_model, d_model), d_model), bk=u(ks[3], (d_model,), d_model),
        wv=u(ks[4], (d_model, d_model), d_model), bv=u(ks[5], (d_model,), d_model),
        wo=u(ks[6], (d_model, d_model), d_model), bo=jnp.zeros((d_model,), jnp.float32),
        ln1_g=jnp.ones((d_model,), jnp.float32), ln1_b=jnp.zeros((d_model,), jnp.float32),
        ln2_g=jnp.ones((d_model,), jnp.float32), ln2_b=jnp.zeros((d_model,), jnp.float32),
        mlp_w1=u(ks[7], (d_model, d_model), d_model), mlp_b1=u(ks[8], (d_model,), d_model),
        mlp_w2=u(ks[9], (d_model, d_model), d_model), mlp_b2=jnp.zeros((d_model,), jnp.float32),
        pred_w=u(ks[10], (d_model, seg_len), d_model), pred_b=u(ks[11], (seg_len,), d_model),
    )


# pure-JAX f32 reference (independent formulation; exact erf GELU)
def reference_forward(x, cross, params):
    b, ts_d, out_seg, d = x.shape
    in_seg = cross.shape[2]
    seg_len = params['pred_w'].shape[1]
    x3 = x.reshape(b * ts_d, out_seg, d).astype(jnp.float32)
    c3 = cross.reshape(b * ts_d, in_seg, d).astype(jnp.float32)
    mm = lambda a, w: jnp.einsum('bsd,de->bse', a, w, precision=HI)
    q = mm(x3, params['wq']) + params['bq']
    k = mm(c3, params['wk']) + params['bk']
    v = mm(c3, params['wv']) + params['bv']
    s = jnp.einsum('bqd,bkd->bqk', q, k, precision=HI) / math.sqrt(d)
    p = jax.nn.softmax(s, axis=-1)
    tmp = mm(jnp.einsum('bqk,bkd->bqd', p, v, precision=HI), params['wo']) + params['bo']
    xr = x3 + tmp

    def ln(u, g, be):
        mu = jnp.mean(u, -1, keepdims=True)
        var = jnp.mean((u - mu) ** 2, -1, keepdims=True)
        return (u - mu) / jnp.sqrt(var + LN_EPS) * g + be

    x1 = ln(xr, params['ln1_g'], params['ln1_b'])
    h = mm(x1, params['mlp_w1']) + params['mlp_b1']
    h = 0.5 * h * (1.0 + jax.lax.erf(h / math.sqrt(2.0)))   # nn.GELU() exact
    y = mm(h, params['mlp_w2']) + params['mlp_b2']
    dec = ln(x1 + y, params['ln2_g'], params['ln2_b'])
    pred = mm(dec, params['pred_w']) + params['pred_b']
    return (dec.reshape(b, ts_d, out_seg, d),
            pred.reshape(b, ts_d * out_seg, seg_len))


# ---------------------------------- main -------------------------------------
if __name__ == "__main__":
    key = jax.random.PRNGKey(0)
    k_x, k_c, k_p = jax.random.split(key, 3)

    batch, ts_d, out_seg, in_seg, d_model, seg_len = 2, 4, 8, 16, 32, 32
    x = jax.random.normal(k_x, (batch, ts_d, out_seg, d_model), jnp.float32)
    cross = jax.random.normal(k_c, (batch, ts_d, in_seg, d_model), jnp.float32)
    params = init_params(k_p, d_model, seg_len)

    dec_out, layer_pred = decoder_layer_forward(x, cross, params)
    dec_out, layer_pred = jax.block_until_ready((dec_out, layer_pred))

    ref_dec, ref_pred = reference_forward(x, cross, params)
    assert dec_out.shape == (batch, ts_d, out_seg, d_model), dec_out.shape
    assert layer_pred.shape == (batch, ts_d * out_seg, seg_len), layer_pred.shape
    # DEFAULT-precision MXU matmuls (single bf16 pass) vs the f32 reference.
    err_dec = float(jnp.max(jnp.abs(dec_out - ref_dec)))
    err_pred = float(jnp.max(jnp.abs(layer_pred - ref_pred)))
    assert err_dec < 3e-2, err_dec
    assert err_pred < 3e-2, err_pred

    print("KERNEL_OK")
</pallas_src>

<mosaic_0001>
module attributes {stable_mosaic.version = 11 : i64} {
  func.func @_decoder_layer_kernel(%arg0: i32, %arg1: memref<4x8x32xf32, #tpu.memory_space<vmem>>, %arg2: memref<4x16x32xf32, #tpu.memory_space<vmem>>, %arg3: memref<32x32xf32, #tpu.memory_space<vmem>>, %arg4: memref<1x32xf32, #tpu.memory_space<vmem>>, %arg5: memref<32x64xf32, #tpu.memory_space<vmem>>, %arg6: memref<1x64xf32, #tpu.memory_space<vmem>>, %arg7: memref<32x32xf32, #tpu.memory_space<vmem>>, %arg8: memref<1x32xf32, #tpu.memory_space<vmem>>, %arg9: memref<1x32xf32, #tpu.memory_space<vmem>>, %arg10: memref<1x32xf32, #tpu.memory_space<vmem>>, %arg11: memref<128x128xf32, #tpu.memory_space<vmem>>, %arg12: memref<128x128xf32, #tpu.memory_space<vmem>>, %arg13: memref<1x128xf32, #tpu.memory_space<vmem>>, %arg14: memref<128x128xf32, #tpu.memory_space<vmem>>, %arg15: memref<1x128xf32, #tpu.memory_space<vmem>>, %arg16: memref<1x128xf32, #tpu.memory_space<vmem>>, %arg17: memref<1x128xf32, #tpu.memory_space<vmem>>, %arg18: memref<128x128xf32, #tpu.memory_space<vmem>>, %arg19: memref<1x128xf32, #tpu.memory_space<vmem>>, %arg20: memref<8x128xf32, #tpu.memory_space<vmem>>, %arg21: memref<8x128xf32, #tpu.memory_space<vmem>>, %arg22: memref<32x32xf32, #tpu.memory_space<vmem>>) attributes {dimension_semantics = [#tpu.dimension_semantics<parallel>], iteration_bounds = array<i64: 2>, scalar_prefetch = 0 : i64, scratch_operands = 1 : i64, tpu.core_type = #tpu.core_type<tc>, window_params = [{transform_indices = @transform_0, window_bounds = array<i64: 4, 8, 32>}, {transform_indices = @transform_1, window_bounds = array<i64: 4, 16, 32>}, {pipeline_mode = #tpu.pipeline_mode<synchronous>, transform_indices = @transform_2, window_bounds = array<i64: 32, 32>}, {pipeline_mode = #tpu.pipeline_mode<synchronous>, transform_indices = @transform_3, window_bounds = array<i64: 1, 32>}, {pipeline_mode = #tpu.pipeline_mode<synchronous>, transform_indices = @transform_4, window_bounds = array<i64: 32, 64>}, {pipeline_mode = #tpu.pipeline_mode<synchronous>, transform_indices = @transform_5, window_bounds = array<i64: 1, 64>}, {pipeline_mode = #tpu.pipeline_mode<synchronous>, transform_indices = @transform_6, window_bounds = array<i64: 32, 32>}, {pipeline_mode = #tpu.pipeline_mode<synchronous>, transform_indices = @transform_7, window_bounds = array<i64: 1, 32>}, {pipeline_mode = #tpu.pipeline_mode<synchronous>, transform_indices = @transform_8, window_bounds = array<i64: 1, 32>}, {pipeline_mode = #tpu.pipeline_mode<synchronous>, transform_indices = @transform_9, window_bounds = array<i64: 1, 32>}, {pipeline_mode = #tpu.pipeline_mode<synchronous>, transform_indices = @transform_10, window_bounds = array<i64: 128, 128>}, {pipeline_mode = #tpu.pipeline_mode<synchronous>, transform_indices = @transform_11, window_bounds = array<i64: 128, 128>}, {pipeline_mode = #tpu.pipeline_mode<synchronous>, transform_indices = @transform_12, window_bounds = array<i64: 1, 128>}, {pipeline_mode = #tpu.pipeline_mode<synchronous>, transform_indices = @transform_13, window_bounds = array<i64: 128, 128>}, {pipeline_mode = #tpu.pipeline_mode<synchronous>, transform_indices = @transform_14, window_bounds = array<i64: 1, 128>}, {pipeline_mode = #tpu.pipeline_mode<synchronous>, transform_indices = @transform_15, window_bounds = array<i64: 1, 128>}, {pipeline_mode = #tpu.pipeline_mode<synchronous>, transform_indices = @transform_16, window_bounds = array<i64: 1, 128>}, {pipeline_mode = #tpu.pipeline_mode<synchronous>, transform_indices = @transform_17, window_bounds = array<i64: 128, 128>}, {pipeline_mode = #tpu.pipeline_mode<synchronous>, transform_indices = @transform_18, window_bounds = array<i64: 1, 128>}, {transform_indices = @transform_19, window_bounds = array<i64: 8, 128>}, {transform_indices = @transform_20, window_bounds = array<i64: 8, 128>}]} {
    %c0 = arith.constant 0 : index
    %c0_0 = arith.constant 0 : index
    %c0_1 = arith.constant 0 : index
    %0 = vector.load %arg1[%c0, %c0_0, %c0_1] : memref<4x8x32xf32, #tpu.memory_space<vmem>>, vector<4x8x32xf32>
    %c0_2 = arith.constant 0 : index
    %c0_3 = arith.constant 0 : index
    %c0_4 = arith.constant 0 : index
    %1 = vector.load %arg2[%c0_2, %c0_3, %c0_4] : memref<4x16x32xf32, #tpu.memory_space<vmem>>, vector<4x16x32xf32>
    %2 = vector.shape_cast %0 : vector<4x8x32xf32> to vector<32x32xf32>
    %3 = vector.shape_cast %1 : vector<4x16x32xf32> to vector<64x32xf32>
    %c0_5 = arith.constant 0 : index
    %c0_6 = arith.constant 0 : index
    %4 = vector.load %arg3[%c0_5, %c0_6] : memref<32x32xf32, #tpu.memory_space<vmem>>, vector<32x32xf32>
    %cst = arith.constant dense<0.000000e+00> : vector<32x32xf32>
    %5 = tpu.matmul %2, %4, %cst {dimension_numbers = #tpu.dot_dimension_numbers<[1], [0], [0], [1], [0, 0, 1, 1], [], []>} : vector<32x32xf32>, vector<32x32xf32>, vector<32x32xf32> -> vector<32x32xf32>
    %c0_7 = arith.constant 0 : index
    %c0_8 = arith.constant 0 : index
    %6 = vector.load %arg4[%c0_7, %c0_8] : memref<1x32xf32, #tpu.memory_space<vmem>>, vector<1x32xf32>
    %7 = vector.broadcast %6 : vector<1x32xf32> to vector<32x32xf32>
    %8 = arith.addf %5, %7 : vector<32x32xf32>
    %c0_9 = arith.constant 0 : index
    %c0_10 = arith.constant 0 : index
    %9 = vector.load %arg5[%c0_9, %c0_10] : memref<32x64xf32, #tpu.memory_space<vmem>>, vector<32x64xf32>
    %cst_11 = arith.constant dense<0.000000e+00> : vector<64x64xf32>
    %10 = tpu.matmul %3, %9, %cst_11 {dimension_numbers = #tpu.dot_dimension_numbers<[1], [0], [0], [1], [0, 0, 1, 1], [], []>} : vector<64x32xf32>, vector<32x64xf32>, vector<64x64xf32> -> vector<64x64xf32>
    %c0_12 = arith.constant 0 : index
    %c0_13 = arith.constant 0 : index
    %11 = vector.load %arg6[%c0_12, %c0_13] : memref<1x64xf32, #tpu.memory_space<vmem>>, vector<1x64xf32>
    %12 = vector.broadcast %11 : vector<1x64xf32> to vector<64x64xf32>
    %13 = arith.addf %10, %12 : vector<64x64xf32>
    %14 = vector.extract_strided_slice %13 {offsets = [0, 0], sizes = [64, 32], strides = [1, 1]} : vector<64x64xf32> to vector<64x32xf32>
    %15 = vector.extract_strided_slice %13 {offsets = [0, 32], sizes = [64, 32], strides = [1, 1]} : vector<64x64xf32> to vector<64x32xf32>
    %16 = vector.shape_cast %8 : vector<32x32xf32> to vector<4x8x32xf32>
    %17 = vector.shape_cast %14 : vector<64x32xf32> to vector<4x16x32xf32>
    %18 = vector.shape_cast %15 : vector<64x32xf32> to vector<4x16x32xf32>
    "tpu.trace_start"() <{level = 10 : i32, message = "bqd,bkd->bqk"}> : () -> ()
    %cst_14 = arith.constant dense<0.000000e+00> : vector<4x8x16xf32>
    %19 = tpu.matmul %16, %17, %cst_14 {dimension_numbers = #tpu.dot_dimension_numbers<[2], [2], [1], [1], [0, 0, 0, 1, 1, 1], [0], [0]>} : vector<4x8x32xf32>, vector<4x16x32xf32>, vector<4x8x16xf32> -> vector<4x8x16xf32>
    "tpu.trace_stop"() : () -> ()
    %cst_15 = arith.constant dense<0xFF800000> : vector<4x8xf32>
    %20 = vector.multi_reduction <maximumf>, %19, %cst_15 [2] : vector<4x8x16xf32> to vector<4x8xf32>
    %21 = vector.shape_cast %20 : vector<4x8xf32> to vector<4x8x1xf32>
    %22 = vector.broadcast %21 : vector<4x8x1xf32> to vector<4x8x16xf32>
    %23 = arith.subf %19, %22 : vector<4x8x16xf32>
    %24 = math.exp %23 : vector<4x8x16xf32>
    %cst_16 = arith.constant dense<0.000000e+00> : vector<4x8xf32>
    %25 = vector.multi_reduction <add>, %24, %cst_16 [2] : vector<4x8x16xf32> to vector<4x8xf32>
    %26 = vector.shape_cast %25 : vector<4x8xf32> to vector<4x8x1xf32>
    %27 = tpu.reciprocal %26 {approx = true} : vector<4x8x1xf32> -> vector<4x8x1xf32>
    %28 = vector.broadcast %27 : vector<4x8x1xf32> to vector<4x8x16xf32>
    %29 = arith.mulf %24, %28 : vector<4x8x16xf32>
    "tpu.trace_start"() <{level = 10 : i32, message = "bqk,bkd->bqd"}> : () -> ()
    %cst_17 = arith.constant dense<0.000000e+00> : vector<4x8x32xf32>
    %30 = tpu.matmul %29, %18, %cst_17 {dimension_numbers = #tpu.dot_dimension_numbers<[2], [1], [1], [2], [0, 0, 0, 1, 1, 2], [0], [0]>} : vector<4x8x16xf32>, vector<4x16x32xf32>, vector<4x8x32xf32> -> vector<4x8x32xf32>
    "tpu.trace_stop"() : () -> ()
    %31 = vector.shape_cast %30 : vector<4x8x32xf32> to vector<32x32xf32>
    %c0_18 = arith.constant 0 : index
    %c0_19 = arith.constant 0 : index
    %32 = vector.load %arg7[%c0_18, %c0_19] : memref<32x32xf32, #tpu.memory_space<vmem>>, vector<32x32xf32>
    %cst_20 = arith.constant dense<0.000000e+00> : vector<32x32xf32>
    %33 = tpu.matmul %31, %32, %cst_20 {dimension_numbers = #tpu.dot_dimension_numbers<[1], [0], [0], [1], [0, 0, 1, 1], [], []>} : vector<32x32xf32>, vector<32x32xf32>, vector<32x32xf32> -> vector<32x32xf32>
    %c0_21 = arith.constant 0 : index
    %c0_22 = arith.constant 0 : index
    %34 = vector.load %arg8[%c0_21, %c0_22] : memref<1x32xf32, #tpu.memory_space<vmem>>, vector<1x32xf32>
    %35 = vector.broadcast %34 : vector<1x32xf32> to vector<32x32xf32>
    %36 = arith.addf %33, %35 : vector<32x32xf32>
    %37 = arith.addf %2, %36 : vector<32x32xf32>
    %cst_23 = arith.constant dense<0.000000e+00> : vector<32xf32>
    %38 = vector.multi_reduction <add>, %37, %cst_23 [1] : vector<32x32xf32> to vector<32xf32>
    %39 = vector.shape_cast %38 : vector<32xf32> to vector<32x1xf32>
    %cst_24 = arith.constant 3.200000e+01 : f32
    %40 = vector.broadcast %cst_24 : f32 to vector<32x1xf32>
    %41 = arith.divf %39, %40 : vector<32x1xf32>
    %42 = vector.broadcast %41 : vector<32x1xf32> to vector<32x32xf32>
    %43 = arith.subf %37, %42 : vector<32x32xf32>
    %44 = arith.mulf %43, %43 : vector<32x32xf32>
    %cst_25 = arith.constant dense<0.000000e+00> : vector<32xf32>
    %45 = vector.multi_reduction <add>, %44, %cst_25 [1] : vector<32x32xf32> to vector<32xf32>
    %46 = vector.shape_cast %45 : vector<32xf32> to vector<32x1xf32>
    %cst_26 = arith.constant 3.200000e+01 : f32
    %47 = vector.broadcast %cst_26 : f32 to vector<32x1xf32>
    %48 = arith.divf %46, %47 : vector<32x1xf32>
    %cst_27 = arith.constant 9.99999974E-6 : f32
    %49 = vector.broadcast %cst_27 : f32 to vector<32x1xf32>
    %50 = arith.addf %48, %49 : vector<32x1xf32>
    %51 = math.rsqrt %50 : vector<32x1xf32>
    %52 = vector.broadcast %51 : vector<32x1xf32> to vector<32x32xf32>
    %53 = arith.mulf %43, %52 : vector<32x32xf32>
    %c0_28 = arith.constant 0 : index
    %c0_29 = arith.constant 0 : index
    %54 = vector.load %arg9[%c0_28, %c0_29] : memref<1x32xf32, #tpu.memory_space<vmem>>, vector<1x32xf32>
    %55 = vector.broadcast %54 : vector<1x32xf32> to vector<32x32xf32>
    %56 = arith.mulf %53, %55 : vector<32x32xf32>
    %c0_30 = arith.constant 0 : index
    %c0_31 = arith.constant 0 : index
    %57 = vector.load %arg10[%c0_30, %c0_31] : memref<1x32xf32, #tpu.memory_space<vmem>>, vector<1x32xf32>
    %58 = vector.broadcast %57 : vector<1x32xf32> to vector<32x32xf32>
    %59 = arith.addf %56, %58 : vector<32x32xf32>
    %c0_32 = arith.constant 0 : index
    %c0_33 = arith.constant 0 : index
    %60 = vector.load %arg22[%c0_32, %c0_33] : memref<32x32xf32, #tpu.memory_space<vmem>>, vector<32x32xf32>
    tpu.vector_store %arg22[%c0_32, %c0_33], %59 {strides = array<i32>} : memref<32x32xf32, #tpu.memory_space<vmem>>, vector<32x32xf32>,
    %c0_34 = arith.constant 0 : index
    %c0_35 = arith.constant 0 : index
    %61 = tpu.strided_load %arg22[%c0_34, %c0_35] {strides = array<i32: 4, 1>} : memref<32x32xf32, #tpu.memory_space<vmem>>, vector<8x32xf32>
    %c1 = arith.constant 1 : index
    %c0_36 = arith.constant 0 : index
    %62 = tpu.strided_load %arg22[%c1, %c0_36] {strides = array<i32: 4, 1>} : memref<32x32xf32, #tpu.memory_space<vmem>>, vector<8x32xf32>
    %c2 = arith.constant 2 : index
    %c0_37 = arith.constant 0 : index
    %63 = tpu.strided_load %arg22[%c2, %c0_37] {strides = array<i32: 4, 1>} : memref<32x32xf32, #tpu.memory_space<vmem>>, vector<8x32xf32>
    %c3 = arith.constant 3 : index
    %c0_38 = arith.constant 0 : index
    %64 = tpu.strided_load %arg22[%c3, %c0_38] {strides = array<i32: 4, 1>} : memref<32x32xf32, #tpu.memory_space<vmem>>, vector<8x32xf32>
    %65 = tpu.concatenate %61, %62, %63, %64 in 1 : vector<8x32xf32>, vector<8x32xf32>, vector<8x32xf32>, vector<8x32xf32> -> vector<8x128xf32>
    %c0_39 = arith.constant 0 : index
    %c0_40 = arith.constant 0 : index
    %66 = vector.load %arg12[%c0_39, %c0_40] : memref<128x128xf32, #tpu.memory_space<vmem>>, vector<128x128xf32>
    %cst_41 = arith.constant dense<0.000000e+00> : vector<8x128xf32>
    %67 = tpu.matmul %65, %66, %cst_41 {dimension_numbers = #tpu.dot_dimension_numbers<[1], [0], [0], [1], [0, 0, 1, 1], [], []>} : vector<8x128xf32>, vector<128x128xf32>, vector<8x128xf32> -> vector<8x128xf32>
    %c0_42 = arith.constant 0 : index
    %c0_43 = arith.constant 0 : index
    %68 = vector.load %arg13[%c0_42, %c0_43] : memref<1x128xf32, #tpu.memory_space<vmem>>, vector<1x128xf32>
    %69 = vector.broadcast %68 : vector<1x128xf32> to vector<8x128xf32>
    %70 = arith.addf %67, %69 : vector<8x128xf32>
    %cst_44 = arith.constant 5.000000e-01 : f32
    %71 = vector.broadcast %cst_44 : f32 to vector<8x128xf32>
    %72 = arith.mulf %71, %70 : vector<8x128xf32>
    %cst_45 = arith.constant 0.707106769 : f32
    %73 = vector.broadcast %cst_45 : f32 to vector<8x128xf32>
    %74 = arith.mulf %70, %73 : vector<8x128xf32>
    %cst_46 = arith.constant 0.000000e+00 : f32
    %75 = vector.broadcast %cst_46 : f32 to vector<8x128xf32>
    %76 = arith.cmpf oge, %74, %75 : vector<8x128xf32>
    %cst_47 = arith.constant 1.000000e+00 : f32
    %cst_48 = arith.constant -1.000000e+00 : f32
    %77 = vector.broadcast %cst_47 : f32 to vector<8x128xf32>
    %78 = vector.broadcast %cst_48 : f32 to vector<8x128xf32>
    %79 = arith.select %76, %77, %78 : vector<8x128xi1>, vector<8x128xf32>
    %80 = math.absf %74 : vector<8x128xf32>
    %cst_49 = arith.constant 0.327591091 : f32
    %81 = vector.broadcast %cst_49 : f32 to vector<8x128xf32>
    %82 = arith.mulf %81, %80 : vector<8x128xf32>
    %cst_50 = arith.constant 1.000000e+00 : f32
    %83 = vector.broadcast %cst_50 : f32 to vector<8x128xf32>
    %84 = arith.addf %83, %82 : vector<8x128xf32>
    %cst_51 = arith.constant 1.000000e+00 : f32
    %85 = vector.broadcast %cst_51 : f32 to vector<8x128xf32>
    %86 = arith.divf %85, %84 : vector<8x128xf32>
    %cst_52 = arith.constant 1.06140542 : f32
    %87 = vector.broadcast %cst_52 : f32 to vector<8x128xf32>
    %88 = arith.mulf %86, %87 : vector<8x128xf32>
    %cst_53 = arith.constant -1.45315206 : f32
    %89 = vector.broadcast %cst_53 : f32 to vector<8x128xf32>
    %90 = arith.addf %89, %88 : vector<8x128xf32>
    %91 = arith.mulf %86, %90 : vector<8x128xf32>
    %cst_54 = arith.constant 1.42141378 : f32
    %92 = vector.broadcast %cst_54 : f32 to vector<8x128xf32>
    %93 = arith.addf %92, %91 : vector<8x128xf32>
    %94 = arith.mulf %86, %93 : vector<8x128xf32>
    %cst_55 = arith.constant -0.284496725 : f32
    %95 = vector.broadcast %cst_55 : f32 to vector<8x128xf32>
    %96 = arith.addf %95, %94 : vector<8x128xf32>
    %97 = arith.mulf %86, %96 : vector<8x128xf32>
    %cst_56 = arith.constant 0.254829586 : f32
    %98 = vector.broadcast %cst_56 : f32 to vector<8x128xf32>
    %99 = arith.addf %98, %97 : vector<8x128xf32>
    %100 = arith.mulf %86, %99 : vector<8x128xf32>
    %cst_57 = arith.constant 0.000000e+00 : f32
    %101 = vector.broadcast %cst_57 : f32 to vector<8x128xf32>
    %102 = arith.subf %101, %80 : vector<8x128xf32>
    %103 = arith.mulf %102, %80 : vector<8x128xf32>
    %104 = math.exp %103 : vector<8x128xf32>
    %105 = arith.mulf %100, %104 : vector<8x128xf32>
    %cst_58 = arith.constant 1.000000e+00 : f32
    %106 = vector.broadcast %cst_58 : f32 to vector<8x128xf32>
    %107 = arith.subf %106, %105 : vector<8x128xf32>
    %108 = arith.mulf %79, %107 : vector<8x128xf32>
    %cst_59 = arith.constant 1.000000e+00 : f32
    %109 = vector.broadcast %cst_59 : f32 to vector<8x128xf32>
    %110 = arith.addf %109, %108 : vector<8x128xf32>
    %111 = arith.mulf %72, %110 : vector<8x128xf32>
    %c0_60 = arith.constant 0 : index
    %c0_61 = arith.constant 0 : index
    %112 = vector.load %arg14[%c0_60, %c0_61] : memref<128x128xf32, #tpu.memory_space<vmem>>, vector<128x128xf32>
    %cst_62 = arith.constant dense<0.000000e+00> : vector<8x128xf32>
    %113 = tpu.matmul %111, %112, %cst_62 {dimension_numbers = #tpu.dot_dimension_numbers<[1], [0], [0], [1], [0, 0, 1, 1], [], []>} : vector<8x128xf32>, vector<128x128xf32>, vector<8x128xf32> -> vector<8x128xf32>
    %c0_63 = arith.constant 0 : index
    %c0_64 = arith.constant 0 : index
    %114 = vector.load %arg15[%c0_63, %c0_64] : memref<1x128xf32, #tpu.memory_space<vmem>>, vector<1x128xf32>
    %115 = vector.broadcast %114 : vector<1x128xf32> to vector<8x128xf32>
    %116 = arith.addf %113, %115 : vector<8x128xf32>
    %117 = arith.addf %65, %116 : vector<8x128xf32>
    %c0_65 = arith.constant 0 : index
    %c0_66 = arith.constant 0 : index
    %118 = vector.load %arg11[%c0_65, %c0_66] : memref<128x128xf32, #tpu.memory_space<vmem>>, vector<128x128xf32>
    %cst_67 = arith.constant dense<0.000000e+00> : vector<8x128xf32>
    %119 = tpu.matmul %117, %118, %cst_67 {dimension_numbers = #tpu.dot_dimension_numbers<[1], [0], [0], [1], [0, 0, 1, 1], [], []>} : vector<8x128xf32>, vector<128x128xf32>, vector<8x128xf32> -> vector<8x128xf32>
    %120 = arith.subf %117, %119 : vector<8x128xf32>
    %121 = arith.mulf %120, %120 : vector<8x128xf32>
    %cst_68 = arith.constant dense<0.000000e+00> : vector<8x128xf32>
    %122 = tpu.matmul %121, %118, %cst_68 {dimension_numbers = #tpu.dot_dimension_numbers<[1], [0], [0], [1], [0, 0, 1, 1], [], []>} : vector<8x128xf32>, vector<128x128xf32>, vector<8x128xf32> -> vector<8x128xf32>
    %cst_69 = arith.constant 9.99999974E-6 : f32
    %123 = vector.broadcast %cst_69 : f32 to vector<8x128xf32>
    %124 = arith.addf %122, %123 : vector<8x128xf32>
    %125 = math.rsqrt %124 : vector<8x128xf32>
    %126 = arith.mulf %120, %125 : vector<8x128xf32>
    %c0_70 = arith.constant 0 : index
    %c0_71 = arith.constant 0 : index
    %127 = vector.load %arg16[%c0_70, %c0_71] : memref<1x128xf32, #tpu.memory_space<vmem>>, vector<1x128xf32>
    %128 = vector.broadcast %127 : vector<1x128xf32> to vector<8x128xf32>
    %129 = arith.mulf %126, %128 : vector<8x128xf32>
    %c0_72 = arith.constant 0 : index
    %c0_73 = arith.constant 0 : index
    %130 = vector.load %arg17[%c0_72, %c0_73] : memref<1x128xf32, #tpu.memory_space<vmem>>, vector<1x128xf32>
    %131 = vector.broadcast %130 : vector<1x128xf32> to vector<8x128xf32>
    %132 = arith.addf %129, %131 : vector<8x128xf32>
    %c0_74 = arith.constant 0 : index
    %c0_75 = arith.constant 0 : index
    %133 = vector.load %arg20[%c0_74, %c0_75] : memref<8x128xf32, #tpu.memory_space<vmem>>, vector<8x128xf32>
    tpu.vector_store %arg20[%c0_74, %c0_75], %132 {strides = array<i32>} : memref<8x128xf32, #tpu.memory_space<vmem>>, vector<8x128xf32>,
    %c0_76 = arith.constant 0 : index
    %c0_77 = arith.constant 0 : index
    %134 = vector.load %arg18[%c0_76, %c0_77] : memref<128x128xf32, #tpu.memory_space<vmem>>, vector<128x128xf32>
    %cst_78 = arith.constant dense<0.000000e+00> : vector<8x128xf32>
    %135 = tpu.matmul %132, %134, %cst_78 {dimension_numbers = #tpu.dot_dimension_numbers<[1], [0], [0], [1], [0, 0, 1, 1], [], []>} : vector<8x128xf32>, vector<128x128xf32>, vector<8x128xf32> -> vector<8x128xf32>
    %c0_79 = arith.constant 0 : index
    %c0_80 = arith.constant 0 : index
    %136 = vector.load %arg19[%c0_79, %c0_80] : memref<1x128xf32, #tpu.memory_space<vmem>>, vector<1x128xf32>
    %137 = vector.broadcast %136 : vector<1x128xf32> to vector<8x128xf32>
    %138 = arith.addf %135, %137 : vector<8x128xf32>
    %c0_81 = arith.constant 0 : index
    %c0_82 = arith.constant 0 : index
    %139 = vector.load %arg21[%c0_81, %c0_82] : memref<8x128xf32, #tpu.memory_space<vmem>>, vector<8x128xf32>
    tpu.vector_store %arg21[%c0_81, %c0_82], %138 {strides = array<i32>} : memref<8x128xf32, #tpu.memory_space<vmem>>, vector<8x128xf32>,
    return
  }
  func.func @transform_0(%arg0: i32) -> (i32, i32, i32) {
    %c0_i32 = arith.constant 0 : i32
    %c0_i32_0 = arith.constant 0 : i32
    %c0_i32_1 = arith.constant 0 : i32
    return %arg0, %c0_i32, %c0_i32_0 : i32, i32, i32
  }
  func.func @transform_1(%arg0: i32) -> (i32, i32, i32) {
    %c0_i32 = arith.constant 0 : i32
    %c0_i32_0 = arith.constant 0 : i32
    %c0_i32_1 = arith.constant 0 : i32
    return %arg0, %c0_i32, %c0_i32_0 : i32, i32, i32
  }
  func.func @transform_2(%arg0: i32) -> (i32, i32) {
    %c0_i32 = arith.constant 0 : i32
    %c0_i32_0 = arith.constant 0 : i32
    %c0_i32_1 = arith.constant 0 : i32
    return %c0_i32, %c0_i32_0 : i32, i32
  }
  func.func @transform_3(%arg0: i32) -> (i32, i32) {
    %c0_i32 = arith.constant 0 : i32
    %c0_i32_0 = arith.constant 0 : i32
    %c0_i32_1 = arith.constant 0 : i32
    return %c0_i32, %c0_i32_0 : i32, i32
  }
  func.func @transform_4(%arg0: i32) -> (i32, i32) {
    %c0_i32 = arith.constant 0 : i32
    %c0_i32_0 = arith.constant 0 : i32
    %c0_i32_1 = arith.constant 0 : i32
    return %c0_i32, %c0_i32_0 : i32, i32
  }
  func.func @transform_5(%arg0: i32) -> (i32, i32) {
    %c0_i32 = arith.constant 0 : i32
    %c0_i32_0 = arith.constant 0 : i32
    %c0_i32_1 = arith.constant 0 : i32
    return %c0_i32, %c0_i32_0 : i32, i32
  }
  func.func @transform_6(%arg0: i32) -> (i32, i32) {
    %c0_i32 = arith.constant 0 : i32
    %c0_i32_0 = arith.constant 0 : i32
    %c0_i32_1 = arith.constant 0 : i32
    return %c0_i32, %c0_i32_0 : i32, i32
  }
  func.func @transform_7(%arg0: i32) -> (i32, i32) {
    %c0_i32 = arith.constant 0 : i32
    %c0_i32_0 = arith.constant 0 : i32
    %c0_i32_1 = arith.constant 0 : i32
    return %c0_i32, %c0_i32_0 : i32, i32
  }
  func.func @transform_8(%arg0: i32) -> (i32, i32) {
    %c0_i32 = arith.constant 0 : i32
    %c0_i32_0 = arith.constant 0 : i32
    %c0_i32_1 = arith.constant 0 : i32
    return %c0_i32, %c0_i32_0 : i32, i32
  }
  func.func @transform_9(%arg0: i32) -> (i32, i32) {
    %c0_i32 = arith.constant 0 : i32
    %c0_i32_0 = arith.constant 0 : i32
    %c0_i32_1 = arith.constant 0 : i32
    return %c0_i32, %c0_i32_0 : i32, i32
  }
  func.func @transform_10(%arg0: i32) -> (i32, i32) {
    %c0_i32 = arith.constant 0 : i32
    %c0_i32_0 = arith.constant 0 : i32
    %c0_i32_1 = arith.constant 0 : i32
    return %c0_i32, %c0_i32_0 : i32, i32
  }
  func.func @transform_11(%arg0: i32) -> (i32, i32) {
    %c0_i32 = arith.constant 0 : i32
    %c0_i32_0 = arith.constant 0 : i32
    %c0_i32_1 = arith.constant 0 : i32
    return %c0_i32, %c0_i32_0 : i32, i32
  }
  func.func @transform_12(%arg0: i32) -> (i32, i32) {
    %c0_i32 = arith.constant 0 : i32
    %c0_i32_0 = arith.constant 0 : i32
    %c0_i32_1 = arith.constant 0 : i32
    return %c0_i32, %c0_i32_0 : i32, i32
  }
  func.func @transform_13(%arg0: i32) -> (i32, i32) {
    %c0_i32 = arith.constant 0 : i32
    %c0_i32_0 = arith.constant 0 : i32
    %c0_i32_1 = arith.constant 0 : i32
    return %c0_i32, %c0_i32_0 : i32, i32
  }
  func.func @transform_14(%arg0: i32) -> (i32, i32) {
    %c0_i32 = arith.constant 0 : i32
    %c0_i32_0 = arith.constant 0 : i32
    %c0_i32_1 = arith.constant 0 : i32
    return %c0_i32, %c0_i32_0 : i32, i32
  }
  func.func @transform_15(%arg0: i32) -> (i32, i32) {
    %c0_i32 = arith.constant 0 : i32
    %c0_i32_0 = arith.constant 0 : i32
    %c0_i32_1 = arith.constant 0 : i32
    return %c0_i32, %c0_i32_0 : i32, i32
  }
  func.func @transform_16(%arg0: i32) -> (i32, i32) {
    %c0_i32 = arith.constant 0 : i32
    %c0_i32_0 = arith.constant 0 : i32
    %c0_i32_1 = arith.constant 0 : i32
    return %c0_i32, %c0_i32_0 : i32, i32
  }
  func.func @transform_17(%arg0: i32) -> (i32, i32) {
    %c0_i32 = arith.constant 0 : i32
    %c0_i32_0 = arith.constant 0 : i32
    %c0_i32_1 = arith.constant 0 : i32
    return %c0_i32, %c0_i32_0 : i32, i32
  }
  func.func @transform_18(%arg0: i32) -> (i32, i32) {
    %c0_i32 = arith.constant 0 : i32
    %c0_i32_0 = arith.constant 0 : i32
    %c0_i32_1 = arith.constant 0 : i32
    return %c0_i32, %c0_i32_0 : i32, i32
  }
  func.func @transform_19(%arg0: i32) -> (i32, i32) {
    %c0_i32 = arith.constant 0 : i32
    %c0_i32_0 = arith.constant 0 : i32
    return %arg0, %c0_i32 : i32, i32
  }
  func.func @transform_20(%arg0: i32) -> (i32, i32) {
    %c0_i32 = arith.constant 0 : i32
    %c0_i32_0 = arith.constant 0 : i32
    return %arg0, %c0_i32 : i32, i32
  }
}

</mosaic_0001>

<llo_original>
// kernel: tpu_custom_call.1
$region0: #{tpu_custom_call.1}
  #allocation0 [shape = 'u32[]', space=smem, size = 0x4, offset = 0x4, fixed_abs, tag = 'smem constant byte address 0x4 - core index']
  #allocation1 [shape = 'u32[72,128]{1,0:T(1,128)}', space=vmem, size = 0x9000, scoped, tag = 'internal scratch']
  #allocation2 [shape = 'f32[32,32]{1,0:T(8,128)}', space=vmem, size = 0x4000, scoped, tag = 'scratch operand']
  %s0 = inlined_call_operand.hbm [shape: f32[8,8,32], index: 0, kind: input, shape index: {}]
  %s1 = inlined_call_operand.hbm [shape: f32[8,16,32], index: 1, kind: input, shape index: {}]
  %s2 = inlined_call_operand.hbm [shape: f32[32,32], index: 2, kind: input, shape index: {}]
  %s3 = inlined_call_operand.vmem [shape: f32[1,32], index: 3, kind: input, shape index: {}]
  %s4 = inlined_call_operand.hbm [shape: f32[32,64], index: 4, kind: input, shape index: {}]
  %s5 = inlined_call_operand.vmem [shape: f32[1,64], index: 5, kind: input, shape index: {}]
  %s6 = inlined_call_operand.hbm [shape: f32[32,32], index: 6, kind: input, shape index: {}]
  %s7 = inlined_call_operand.vmem [shape: f32[1,32], index: 7, kind: input, shape index: {}]
  %s8 = inlined_call_operand.vmem [shape: f32[1,32], index: 8, kind: input, shape index: {}]
  %s9 = inlined_call_operand.vmem [shape: f32[1,32], index: 9, kind: input, shape index: {}]
  %s10 = inlined_call_operand.hbm [shape: f32[128,128], index: 10, kind: input, shape index: {}]
  %s11 = inlined_call_operand.hbm [shape: f32[128,128], index: 11, kind: input, shape index: {}]
  %s12 = inlined_call_operand.vmem [shape: f32[1,128], index: 12, kind: input, shape index: {}]
  %s13 = inlined_call_operand.hbm [shape: f32[128,128], index: 13, kind: input, shape index: {}]
  %s14 = inlined_call_operand.vmem [shape: f32[1,128], index: 14, kind: input, shape index: {}]
  %s15 = inlined_call_operand.vmem [shape: f32[1,128], index: 15, kind: input, shape index: {}]
  %s16 = inlined_call_operand.vmem [shape: f32[1,128], index: 16, kind: input, shape index: {}]
  %s17 = inlined_call_operand.hbm [shape: f32[128,128], index: 17, kind: input, shape index: {}]
  %s18 = inlined_call_operand.vmem [shape: f32[1,128], index: 18, kind: input, shape index: {}]
  %s19 = inlined_call_operand.hbm [shape: f32[16,128], index: 19, kind: output, shape index: {0}]
  %s20 = inlined_call_operand.hbm [shape: f32[16,128], index: 20, kind: output, shape index: {1}]
  %21 = xla_tuple %s19, %s20
  %s22 = sld [smem:[#allocation0]]
  $region153: #{tpu_custom_call.1} parent=0
    _
  %s24 = ssub.s32 1, %s22
  %s25 = scalar_select 0, %s24, %s22
  $region1: #{tpu_custom_call.1} parent=0
    #allocation3 [shape = 'u8[32768]{0}', space=vmem, size = 0x8000, scoped, tag = 'input window, operand 0']
    #allocation4 [shape = 's32[2]{0}', space=sflag, size = 0x8, scoped, tag = 'scoped memory for tpu_custom_call.1']
    #allocation5 [shape = 's32[2]{0}', space=sflag, size = 0x8, scoped, tag = 'scoped memory for tpu_custom_call.1']
    #allocation6 [shape = 'u8[65536]{0}', space=vmem, size = 0x10000, scoped, tag = 'input window, operand 1']
    #allocation7 [shape = 's32[2]{0}', space=sflag, size = 0x8, scoped, tag = 'scoped memory for tpu_custom_call.1']
    #allocation8 [shape = 'u8[16384]{0}', space=vmem, size = 0x4000, scoped, tag = 'input window, operand 2, single buffered']
    #allocation9 [shape = 'u8[16384]{0}', space=vmem, size = 0x4000, scoped, tag = 'input window, operand 4, single buffered']
    #allocation10 [shape = 's32[1]{0}', space=sflag, size = 0x4, scoped, tag = 'scoped memory for tpu_custom_call.1']
    #allocation11 [shape = 'u8[16384]{0}', space=vmem, size = 0x4000, scoped, tag = 'input window, operand 6, single buffered']
    #allocation12 [shape = 'u8[65536]{0}', space=vmem, size = 0x10000, scoped, tag = 'input window, operand 10, single buffered']
    #allocation13 [shape = 's32[1]{0}', space=sflag, size = 0x4, scoped, tag = 'scoped memory for tpu_custom_call.1']
    #allocation14 [shape = 'u8[65536]{0}', space=vmem, size = 0x10000, scoped, tag = 'input window, operand 11, single buffered']
    #allocation15 [shape = 'u8[65536]{0}', space=vmem, size = 0x10000, scoped, tag = 'input window, operand 13, single buffered']
    #allocation16 [shape = 's32[1]{0}', space=sflag, size = 0x4, scoped, tag = 'scoped memory for tpu_custom_call.1']
    #allocation17 [shape = 'u8[65536]{0}', space=vmem, size = 0x10000, scoped, tag = 'input window, operand 17, single buffered']
    #allocation18 [shape = 'u8[8192]{0}', space=vmem, size = 0x2000, scoped, tag = 'output window, operand 0']
    #allocation19 [shape = 'u8[8192]{0}', space=vmem, size = 0x2000, scoped, tag = 'output window, operand 1']
    #allocation20 [shape = 's32[2]{0}', space=sflag, size = 0x8, scoped, tag = 'scoped memory for tpu_custom_call.1']
    %26 = vsyncpa [#allocation4], 0
    %s27 = scalar_lea.sflag [#allocation4], 1
    %28 = vsyncpa %s27, 0
    %29 = vsyncpa [#allocation7], 0
    %s30 = scalar_lea.sflag [#allocation7], 1
    %31 = vsyncpa %s30, 0
    %32 = vsyncpa [#allocation10], 0
    %33 = vsyncpa [#allocation13], 0
    %34 = vsyncpa [#allocation16], 0
    %35 = vsyncpa [#allocation5], 0
    %s36 = scalar_lea.sflag [#allocation5], 1
    %37 = vsyncpa %s36, 0
    %38 = vsyncpa [#allocation20], 0
    %s39 = scalar_lea.sflag [#allocation20], 1
    %40 = vsyncpa %s39, 0
    loop: start=0, step=1, limit=4
    $region2: #{tpu_custom_call.1} parent=1 // loop_pre_header
      _
    $region3: #{tpu_custom_call.1} parent=1 // loop_header
      %s42 = sphi 0, %s46
      %p43 = scmp.ge.s32.totalorder %s42, 4
      %s52 = sphi 0, %s54
      %s55 = sphi 0, %s52
      %s56 = sphi 0, %s55
      %s72 = sphi 0, %s56
      %s78 = sphi 0, %s80
      %s81 = sphi 0, %s78
      %s82 = sphi 0, %s81
      %s98 = sphi 0, %s82
      %s102 = sphi 0, %s102
      %s104 = sphi 0, %s102
      %s105 = sphi 0, %s104
      %s119 = sphi 0, %s105
      %s123 = sphi 0, %s123
      %s125 = sphi 0, %s123
      %s126 = sphi 0, %s125
      %s140 = sphi 0, %s126
      %s144 = sphi 0, %s144
      %s146 = sphi 0, %s144
      %s147 = sphi 0, %s146
      %s161 = sphi 0, %s147
      %s165 = sphi 0, %s165
      %s167 = sphi 0, %s165
      %s168 = sphi 0, %s167
      %s182 = sphi 0, %s168
      %s186 = sphi 0, %s186
      %s188 = sphi 0, %s186
      %s189 = sphi 0, %s188
      %s203 = sphi 0, %s189
      %s207 = sphi 0, %s207
      %s209 = sphi 0, %s207
      %s210 = sphi 0, %s209
      %s224 = sphi 0, %s210
      %s228 = sphi 0, %s228
      %s230 = sphi 0, %s228
      %s231 = sphi 0, %s230
      %s245 = sphi 0, %s231
      %s249 = sphi 0, %s249
      %s251 = sphi 0, %s249
      %s252 = sphi 0, %s251
      %s266 = sphi 0, %s252
      %s270 = sphi 0, %s270
      %s272 = sphi 0, %s270
      %s273 = sphi 0, %s272
      %s287 = sphi 0, %s273
      %s291 = sphi 0, %s291
      %s293 = sphi 0, %s291
      %s294 = sphi 0, %s293
      %s308 = sphi 0, %s294
      %s312 = sphi 0, %s312
      %s314 = sphi 0, %s312
      %s315 = sphi 0, %s314
      %s329 = sphi 0, %s315
      %s333 = sphi 0, %s333
      %s335 = sphi 0, %s333
      %s336 = sphi 0, %s335
      %s350 = sphi 0, %s336
      %s354 = sphi 0, %s354
      %s356 = sphi 0, %s354
      %s357 = sphi 0, %s356
      %s371 = sphi 0, %s357
      %s375 = sphi 0, %s375
      %s377 = sphi 0, %s375
      %s378 = sphi 0, %s377
      %s392 = sphi 0, %s378
      %s396 = sphi 0, %s396
      %s398 = sphi 0, %s396
      %s399 = sphi 0, %s398
      %s413 = sphi 0, %s399
      %s417 = sphi 0, %s417
      %s419 = sphi 0, %s417
      %s420 = sphi 0, %s419
      %s434 = sphi 0, %s420
      %s438 = sphi 0, %s438
      %s440 = sphi 0, %s438
      %s441 = sphi 0, %s440
      %s455 = sphi 0, %s441
      %s461 = sphi 0, %s463
      %s464 = sphi 0, %s461
      %s465 = sphi 0, %s464
      %s481 = sphi 0, %s465
      %s487 = sphi 0, %s489
      %s490 = sphi 0, %s487
      %s491 = sphi 0, %s490
      %s507 = sphi 0, %s491
    $region4: #{tpu_custom_call.1} parent=1 // loop_header_branch
      %45 = sbr.rel (%p43) target = $region8
    $region5: #{tpu_custom_call.1} parent=1 // loop_body
      %s47 = ssub.s32 %s42, 1
      %s48 = ssub.s32 %s42, 2
      %s49 = sadd.s32 %s42, 1
      %s50 = ssub.s32 %s42, %s49
      %p51 = scmp.eq.s32.totalorder %s50, 0
      %s53 = sadd.s32 %s52, 1
      %s54 = scalar_select %p51, %s52, %s53
      %p57 = pneg %p51
      %p58 = scmp.eq.s32.totalorder %s42, 1
      %p59 = por %p57, %p58
      %p60 = scmp.ne.s32.totalorder %s52, %s55
      %p61 = scmp.eq.s32.totalorder %s42, 0
      %p62 = por %p60, %p61
      %p63 = scmp.ne.s32.totalorder %s52, %s55
      %p64 = scmp.eq.s32.totalorder %s47, 1
      %p65 = por %p63, %p64
      %p66 = scmp.ne.s32.totalorder %s55, %s56
      %p67 = scmp.eq.s32.totalorder %s47, 0
      %p68 = por %p66, %p67
      %p69 = scmp.ne.s32.totalorder %s55, %s56
      %p70 = scmp.eq.s32.totalorder %s48, 1
      %p71 = por %p69, %p70
      %p73 = scmp.ne.s32.totalorder %s56, %s72
      %p74 = scmp.eq.s32.totalorder %s48, 0
      %p75 = por %p73, %p74
      %s76 = ssub.s32 %s42, %s49
      %p77 = scmp.eq.s32.totalorder %s76, 0
      %s79 = sadd.s32 %s78, 1
      %s80 = scalar_select %p77, %s78, %s79
      %p83 = pneg %p77
      %p84 = scmp.eq.s32.totalorder %s42, 1
      %p85 = por %p83, %p84
      %p86 = scmp.ne.s32.totalorder %s78, %s81
      %p87 = scmp.eq.s32.totalorder %s42, 0
      %p88 = por %p86, %p87
      %p89 = scmp.ne.s32.totalorder %s78, %s81
      %p90 = scmp.eq.s32.totalorder %s47, 1
      %p91 = por %p89, %p90
      %p92 = scmp.ne.s32.totalorder %s81, %s82
      %p93 = scmp.eq.s32.totalorder %s47, 0
      %p94 = por %p92, %p93
      %p95 = scmp.ne.s32.totalorder %s81, %s82
      %p96 = scmp.eq.s32.totalorder %s48, 1
      %p97 = por %p95, %p96
      %p99 = scmp.ne.s32.totalorder %s82, %s98
      %p100 = scmp.eq.s32.totalorder %s48, 0
      %p101 = por %p99, %p100
      %s103 = sadd.s32 %s102, 1
      %p106 = scmp.eq.s32.totalorder %s42, 1
      %p107 = scmp.ne.s32.totalorder %s102, %s104
      %p108 = scmp.eq.s32.totalorder %s42, 0
      %p109 = por %p107, %p108
      %p110 = scmp.ne.s32.totalorder %s102, %s104
      %p111 = scmp.eq.s32.totalorder %s47, 1
      %p112 = por %p110, %p111
      %p113 = scmp.ne.s32.totalorder %s104, %s105
      %p114 = scmp.eq.s32.totalorder %s47, 0
      %p115 = por %p113, %p114
      %p116 = scmp.ne.s32.totalorder %s104, %s105
      %p117 = scmp.eq.s32.totalorder %s48, 1
      %p118 = por %p116, %p117
      %p120 = scmp.ne.s32.totalorder %s105, %s119
      %p121 = scmp.eq.s32.totalorder %s48, 0
      %p122 = por %p120, %p121
      %s124 = sadd.s32 %s123, 1
      %p127 = scmp.eq.s32.totalorder %s42, 1
      %p128 = scmp.ne.s32.totalorder %s123, %s125
      %p129 = scmp.eq.s32.totalorder %s42, 0
      %p130 = por %p128, %p129
      %p131 = scmp.ne.s32.totalorder %s123, %s125
      %p132 = scmp.eq.s32.totalorder %s47, 1
      %p133 = por %p131, %p132
      %p134 = scmp.ne.s32.totalorder %s125, %s126
      %p135 = scmp.eq.s32.totalorder %s47, 0
      %p136 = por %p134, %p135
      %p137 = scmp.ne.s32.totalorder %s125, %s126
      %p138 = scmp.eq.s32.totalorder %s48, 1
      %p139 = por %p137, %p138
      %p141 = scmp.ne.s32.totalorder %s126, %s140
      %p142 = scmp.eq.s32.totalorder %s48, 0
      %p143 = por %p141, %p142
      %s145 = sadd.s32 %s144, 1
      %p148 = scmp.eq.s32.totalorder %s42, 1
      %p149 = scmp.ne.s32.totalorder %s144, %s146
      %p150 = scmp.eq.s32.totalorder %s42, 0
      %p151 = por %p149, %p150
      %p152 = scmp.ne.s32.totalorder %s144, %s146
      %p153 = scmp.eq.s32.totalorder %s47, 1
      %p154 = por %p152, %p153
      %p155 = scmp.ne.s32.totalorder %s146, %s147
      %p156 = scmp.eq.s32.totalorder %s47, 0
      %p157 = por %p155, %p156
      %p158 = scmp.ne.s32.totalorder %s146, %s147
      %p159 = scmp.eq.s32.totalorder %s48, 1
      %p160 = por %p158, %p159
      %p162 = scmp.ne.s32.totalorder %s147, %s161
      %p163 = scmp.eq.s32.totalorder %s48, 0
      %p164 = por %p162, %p163
      %s166 = sadd.s32 %s165, 1
      %p169 = scmp.eq.s32.totalorder %s42, 1
      %p170 = scmp.ne.s32.totalorder %s165, %s167
      %p171 = scmp.eq.s32.totalorder %s42, 0
      %p172 = por %p170, %p171
      %p173 = scmp.ne.s32.totalorder %s165, %s167
      %p174 = scmp.eq.s32.totalorder %s47, 1
      %p175 = por %p173, %p174
      %p176 = scmp.ne.s32.totalorder %s167, %s168
      %p177 = scmp.eq.s32.totalorder %s47, 0
      %p178 = por %p176, %p177
      %p179 = scmp.ne.s32.totalorder %s167, %s168
      %p180 = scmp.eq.s32.totalorder %s48, 1
      %p181 = por %p179, %p180
      %p183 = scmp.ne.s32.totalorder %s168, %s182
      %p184 = scmp.eq.s32.totalorder %s48, 0
      %p185 = por %p183, %p184
      %s187 = sadd.s32 %s186, 1
      %p190 = scmp.eq.s32.totalorder %s42, 1
      %p191 = scmp.ne.s32.totalorder %s186, %s188
      %p192 = scmp.eq.s32.totalorder %s42, 0
      %p193 = por %p191, %p192
      %p194 = scmp.ne.s32.totalorder %s186, %s188
      %p195 = scmp.eq.s32.totalorder %s47, 1
      %p196 = por %p194, %p195
      %p197 = scmp.ne.s32.totalorder %s188, %s189
      %p198 = scmp.eq.s32.totalorder %s47, 0
      %p199 = por %p197, %p198
      %p200 = scmp.ne.s32.totalorder %s188, %s189
      %p201 = scmp.eq.s32.totalorder %s48, 1
      %p202 = por %p200, %p201
      %p204 = scmp.ne.s32.totalorder %s189, %s203
      %p205 = scmp.eq.s32.totalorder %s48, 0
      %p206 = por %p204, %p205
      %s208 = sadd.s32 %s207, 1
      %p211 = scmp.eq.s32.totalorder %s42, 1
      %p212 = scmp.ne.s32.totalorder %s207, %s209
      %p213 = scmp.eq.s32.totalorder %s42, 0
      %p214 = por %p212, %p213
      %p215 = scmp.ne.s32.totalorder %s207, %s209
      %p216 = scmp.eq.s32.totalorder %s47, 1
      %p217 = por %p215, %p216
      %p218 = scmp.ne.s32.totalorder %s209, %s210
      %p219 = scmp.eq.s32.totalorder %s47, 0
      %p220 = por %p218, %p219
      %p221 = scmp.ne.s32.totalorder %s209, %s210
      %p222 = scmp.eq.s32.totalorder %s48, 1
      %p223 = por %p221, %p222
      %p225 = scmp.ne.s32.totalorder %s210, %s224
      %p226 = scmp.eq.s32.totalorder %s48, 0
      %p227 = por %p225, %p226
      %s229 = sadd.s32 %s228, 1
      %p232 = scmp.eq.s32.totalorder %s42, 1
      %p233 = scmp.ne.s32.totalorder %s228, %s230
      %p234 = scmp.eq.s32.totalorder %s42, 0
      %p235 = por %p233, %p234
      %p236 = scmp.ne.s32.totalorder %s228, %s230
      %p237 = scmp.eq.s32.totalorder %s47, 1
      %p238 = por %p236, %p237
      %p239 = scmp.ne.s32.totalorder %s230, %s231
      %p240 = scmp.eq.s32.totalorder %s47, 0
      %p241 = por %p239, %p240
      %p242 = scmp.ne.s32.totalorder %s230, %s231
      %p243 = scmp.eq.s32.totalorder %s48, 1
      %p244 = por %p242, %p243
      %p246 = scmp.ne.s32.totalorder %s231, %s245
      %p247 = scmp.eq.s32.totalorder %s48, 0
      %p248 = por %p246, %p247
      %s250 = sadd.s32 %s249, 1
      %p253 = scmp.eq.s32.totalorder %s42, 1
      %p254 = scmp.ne.s32.totalorder %s249, %s251
      %p255 = scmp.eq.s32.totalorder %s42, 0
      %p256 = por %p254, %p255
      %p257 = scmp.ne.s32.totalorder %s249, %s251
      %p258 = scmp.eq.s32.totalorder %s47, 1
      %p259 = por %p257, %p258
      %p260 = scmp.ne.s32.totalorder %s251, %s252
      %p261 = scmp.eq.s32.totalorder %s47, 0
      %p262 = por %p260, %p261
      %p263 = scmp.ne.s32.totalorder %s251, %s252
      %p264 = scmp.eq.s32.totalorder %s48, 1
      %p265 = por %p263, %p264
      %p267 = scmp.ne.s32.totalorder %s252, %s266
      %p268 = scmp.eq.s32.totalorder %s48, 0
      %p269 = por %p267, %p268
      %s271 = sadd.s32 %s270, 1
      %p274 = scmp.eq.s32.totalorder %s42, 1
      %p275 = scmp.ne.s32.totalorder %s270, %s272
      %p276 = scmp.eq.s32.totalorder %s42, 0
      %p277 = por %p275, %p276
      %p278 = scmp.ne.s32.totalorder %s270, %s272
      %p279 = scmp.eq.s32.totalorder %s47, 1
      %p280 = por %p278, %p279
      %p281 = scmp.ne.s32.totalorder %s272, %s273
      %p282 = scmp.eq.s32.totalorder %s47, 0
      %p283 = por %p281, %p282
      %p284 = scmp.ne.s32.totalorder %s272, %s273
      %p285 = scmp.eq.s32.totalorder %s48, 1
      %p286 = por %p284, %p285
      %p288 = scmp.ne.s32.totalorder %s273, %s287
      %p289 = scmp.eq.s32.totalorder %s48, 0
      %p290 = por %p288, %p289
      %s292 = sadd.s32 %s291, 1
      %p295 = scmp.eq.s32.totalorder %s42, 1
      %p296 = scmp.ne.s32.totalorder %s291, %s293
      %p297 = scmp.eq.s32.totalorder %s42, 0
      %p298 = por %p296, %p297
      %p299 = scmp.ne.s32.totalorder %s291, %s293
      %p300 = scmp.eq.s32.totalorder %s47, 1
      %p301 = por %p299, %p300
      %p302 = scmp.ne.s32.totalorder %s293, %s294
      %p303 = scmp.eq.s32.totalorder %s47, 0
      %p304 = por %p302, %p303
      %p305 = scmp.ne.s32.totalorder %s293, %s294
      %p306 = scmp.eq.s32.totalorder %s48, 1
      %p307 = por %p305, %p306
      %p309 = scmp.ne.s32.totalorder %s294, %s308
      %p310 = scmp.eq.s32.totalorder %s48, 0
      %p311 = por %p309, %p310
      %s313 = sadd.s32 %s312, 1
      %p316 = scmp.eq.s32.totalorder %s42, 1
      %p317 = scmp.ne.s32.totalorder %s312, %s314
      %p318 = scmp.eq.s32.totalorder %s42, 0
      %p319 = por %p317, %p318
      %p320 = scmp.ne.s32.totalorder %s312, %s314
      %p321 = scmp.eq.s32.totalorder %s47, 1
      %p322 = por %p320, %p321
      %p323 = scmp.ne.s32.totalorder %s314, %s315
      %p324 = scmp.eq.s32.totalorder %s47, 0
      %p325 = por %p323, %p324
      %p326 = scmp.ne.s32.totalorder %s314, %s315
      %p327 = scmp.eq.s32.totalorder %s48, 1
      %p328 = por %p326, %p327
      %p330 = scmp.ne.s32.totalorder %s315, %s329
      %p331 = scmp.eq.s32.totalorder %s48, 0
      %p332 = por %p330, %p331
      %s334 = sadd.s32 %s333, 1
      %p337 = scmp.eq.s32.totalorder %s42, 1
      %p338 = scmp.ne.s32.totalorder %s333, %s335
      %p339 = scmp.eq.s32.totalorder %s42, 0
      %p340 = por %p338, %p339
      %p341 = scmp.ne.s32.totalorder %s333, %s335
      %p342 = scmp.eq.s32.totalorder %s47, 1
      %p343 = por %p341, %p342
      %p344 = scmp.ne.s32.totalorder %s335, %s336
      %p345 = scmp.eq.s32.totalorder %s47, 0
      %p346 = por %p344, %p345
      %p347 = scmp.ne.s32.totalorder %s335, %s336
      %p348 = scmp.eq.s32.totalorder %s48, 1
      %p349 = por %p347, %p348
      %p351 = scmp.ne.s32.totalorder %s336, %s350
      %p352 = scmp.eq.s32.totalorder %s48, 0
      %p353 = por %p351, %p352
      %s355 = sadd.s32 %s354, 1
      %p358 = scmp.eq.s32.totalorder %s42, 1
      %p359 = scmp.ne.s32.totalorder %s354, %s356
      %p360 = scmp.eq.s32.totalorder %s42, 0
      %p361 = por %p359, %p360
      %p362 = scmp.ne.s32.totalorder %s354, %s356
      %p363 = scmp.eq.s32.totalorder %s47, 1
      %p364 = por %p362, %p363
      %p365 = scmp.ne.s32.totalorder %s356, %s357
      %p366 = scmp.eq.s32.totalorder %s47, 0
      %p367 = por %p365, %p366
      %p368 = scmp.ne.s32.totalorder %s356, %s357
      %p369 = scmp.eq.s32.totalorder %s48, 1
      %p370 = por %p368, %p369
      %p372 = scmp.ne.s32.totalorder %s357, %s371
      %p373 = scmp.eq.s32.totalorder %s48, 0
      %p374 = por %p372, %p373
      %s376 = sadd.s32 %s375, 1
      %p379 = scmp.eq.s32.totalorder %s42, 1
      %p380 = scmp.ne.s32.totalorder %s375, %s377
      %p381 = scmp.eq.s32.totalorder %s42, 0
      %p382 = por %p380, %p381
      %p383 = scmp.ne.s32.totalorder %s375, %s377
      %p384 = scmp.eq.s32.totalorder %s47, 1
      %p385 = por %p383, %p384
      %p386 = scmp.ne.s32.totalorder %s377, %s378
      %p387 = scmp.eq.s32.totalorder %s47, 0
      %p388 = por %p386, %p387
      %p389 = scmp.ne.s32.totalorder %s377, %s378
      %p390 = scmp.eq.s32.totalorder %s48, 1
      %p391 = por %p389, %p390
      %p393 = scmp.ne.s32.totalorder %s378, %s392
      %p394 = scmp.eq.s32.totalorder %s48, 0
      %p395 = por %p393, %p394
      %s397 = sadd.s32 %s396, 1
      %p400 = scmp.eq.s32.totalorder %s42, 1
      %p401 = scmp.ne.s32.totalorder %s396, %s398
      %p402 = scmp.eq.s32.totalorder %s42, 0
      %p403 = por %p401, %p402
      %p404 = scmp.ne.s32.totalorder %s396, %s398
      %p405 = scmp.eq.s32.totalorder %s47, 1
      %p406 = por %p404, %p405
      %p407 = scmp.ne.s32.totalorder %s398, %s399
      %p408 = scmp.eq.s32.totalorder %s47, 0
      %p409 = por %p407, %p408
      %p410 = scmp.ne.s32.totalorder %s398, %s399
      %p411 = scmp.eq.s32.totalorder %s48, 1
      %p412 = por %p410, %p411
      %p414 = scmp.ne.s32.totalorder %s399, %s413
      %p415 = scmp.eq.s32.totalorder %s48, 0
      %p416 = por %p414, %p415
      %s418 = sadd.s32 %s417, 1
      %p421 = scmp.eq.s32.totalorder %s42, 1
      %p422 = scmp.ne.s32.totalorder %s417, %s419
      %p423 = scmp.eq.s32.totalorder %s42, 0
      %p424 = por %p422, %p423
      %p425 = scmp.ne.s32.totalorder %s417, %s419
      %p426 = scmp.eq.s32.totalorder %s47, 1
      %p427 = por %p425, %p426
      %p428 = scmp.ne.s32.totalorder %s419, %s420
      %p429 = scmp.eq.s32.totalorder %s47, 0
      %p430 = por %p428, %p429
      %p431 = scmp.ne.s32.totalorder %s419, %s420
      %p432 = scmp.eq.s32.totalorder %s48, 1
      %p433 = por %p431, %p432
      %p435 = scmp.ne.s32.totalorder %s420, %s434
      %p436 = scmp.eq.s32.totalorder %s48, 0
      %p437 = por %p435, %p436
      %s439 = sadd.s32 %s438, 1
      %p442 = scmp.eq.s32.totalorder %s42, 1
      %p443 = scmp.ne.s32.totalorder %s438, %s440
      %p444 = scmp.eq.s32.totalorder %s42, 0
      %p445 = por %p443, %p444
      %p446 = scmp.ne.s32.totalorder %s438, %s440
      %p447 = scmp.eq.s32.totalorder %s47, 1
      %p448 = por %p446, %p447
      %p449 = scmp.ne.s32.totalorder %s440, %s441
      %p450 = scmp.eq.s32.totalorder %s47, 0
      %p451 = por %p449, %p450
      %p452 = scmp.ne.s32.totalorder %s440, %s441
      %p453 = scmp.eq.s32.totalorder %s48, 1
      %p454 = por %p452, %p453
      %p456 = scmp.ne.s32.totalorder %s441, %s455
      %p457 = scmp.eq.s32.totalorder %s48, 0
      %p458 = por %p456, %p457
      %s459 = ssub.s32 %s42, %s49
      %p460 = scmp.eq.s32.totalorder %s459, 0
      %s462 = sadd.s32 %s461, 1
      %s463 = scalar_select %p460, %s461, %s462
      %p466 = pneg %p460
      %p467 = scmp.eq.s32.totalorder %s42, 1
      %p468 = por %p466, %p467
      %p469 = scmp.ne.s32.totalorder %s461, %s464
      %p470 = scmp.eq.s32.totalorder %s42, 0
      %p471 = por %p469, %p470
      %p472 = scmp.ne.s32.totalorder %s461, %s464
      %p473 = scmp.eq.s32.totalorder %s47, 1
      %p474 = por %p472, %p473
      %p475 = scmp.ne.s32.totalorder %s464, %s465
      %p476 = scmp.eq.s32.totalorder %s47, 0
      %p477 = por %p475, %p476
      %p478 = scmp.ne.s32.totalorder %s464, %s465
      %p479 = scmp.eq.s32.totalorder %s48, 1
      %p480 = por %p478, %p479
      %p482 = scmp.ne.s32.totalorder %s465, %s481
      %p483 = scmp.eq.s32.totalorder %s48, 0
      %p484 = por %p482, %p483
      %s485 = ssub.s32 %s42, %s49
      %p486 = scmp.eq.s32.totalorder %s485, 0
      %s488 = sadd.s32 %s487, 1
      %s489 = scalar_select %p486, %s487, %s488
      %p492 = pneg %p486
      %p493 = scmp.eq.s32.totalorder %s42, 1
      %p494 = por %p492, %p493
      %p495 = scmp.ne.s32.totalorder %s487, %s490
      %p496 = scmp.eq.s32.totalorder %s42, 0
      %p497 = por %p495, %p496
      %p498 = scmp.ne.s32.totalorder %s487, %s490
      %p499 = scmp.eq.s32.totalorder %s47, 1
      %p500 = por %p498, %p499
      %p501 = scmp.ne.s32.totalorder %s490, %s491
      %p502 = scmp.eq.s32.totalorder %s47, 0
      %p503 = por %p501, %p502
      %p504 = scmp.ne.s32.totalorder %s490, %s491
      %p505 = scmp.eq.s32.totalorder %s48, 1
      %p506 = por %p504, %p505
      %p508 = scmp.ne.s32.totalorder %s491, %s507
      %p509 = scmp.eq.s32.totalorder %s48, 0
      %p510 = por %p508, %p509
      %p511 = scmp.le.s32.totalorder 1, %s42
      %p512 = scmp.lt.s32.totalorder %s42, 3
      %p513 = pnand %p511, %p512
      %p514 = pneg %p513
      // Predicated region
      $region9: #{tpu_custom_call.1} parent=5 // pred_check
        _
      $region10: #{tpu_custom_call.1} parent=5 // pred_check_branch
        %516 = sbr.rel (%p513) target = $region12
      $region11: #{tpu_custom_call.1} parent=5 // pred_region
        %s517 = ssub.s32 %s42, 1
        // Predicated region
        $region13: #{tpu_custom_call.1} parent=11 // pred_check
          %p518 = pneg %p115
        $region14: #{tpu_custom_call.1} parent=11 // pred_check_branch
          %520 = sbr.rel (%p518) target = $region16
        $region15: #{tpu_custom_call.1} parent=11 // pred_region
          %522 = vsyncadd [#allocation7], 0
          %s523 = sshll.u32 %s2, 4
          %s524 = int_to_ptr.hbm [resolvable:$true] %s523
          %s525 = sshll.u32 [#allocation8], 4
          %s526 = int_to_ptr.vmem [resolvable:$true] %s525
          %531 = dma.hbm_to_vmem [thread:$0]  %s524, 512, %s526, [#allocation7], 128, 128, 8
        $region16: #{tpu_custom_call.1} parent=11 // pred_fallthru
          _
        // Predicated region
        $region17: #{tpu_custom_call.1} parent=11 // pred_check
          %p532 = pneg %p136
        $region18: #{tpu_custom_call.1} parent=11 // pred_check_branch
          %534 = sbr.rel (%p532) target = $region20
        $region19: #{tpu_custom_call.1} parent=11 // pred_region
          _
        $region20: #{tpu_custom_call.1} parent=11 // pred_fallthru
          _
        // Predicated region
        $region21: #{tpu_custom_call.1} parent=11 // pred_check
          %p535 = pneg %p157
        $region22: #{tpu_custom_call.1} parent=11 // pred_check_branch
          %537 = sbr.rel (%p535) target = $region24
        $region23: #{tpu_custom_call.1} parent=11 // pred_region
          %539 = vsyncadd [#allocation10], 0
          %s540 = sshll.u32 %s4, 4
          %s541 = int_to_ptr.hbm [resolvable:$true] %s540
          %s542 = sshll.u32 [#allocation9], 4
          %s543 = int_to_ptr.vmem [resolvable:$true] %s542
          %548 = dma.hbm_to_vmem [thread:$0]  %s541, 512, %s543, [#allocation10], 128, 128, 8
        $region24: #{tpu_custom_call.1} parent=11 // pred_fallthru
          _
        // Predicated region
        $region25: #{tpu_custom_call.1} parent=11 // pred_check
          %p549 = pneg %p178
        $region26: #{tpu_custom_call.1} parent=11 // pred_check_branch
          %551 = sbr.rel (%p549) target = $region28
        $region27: #{tpu_custom_call.1} parent=11 // pred_region
          _
        $region28: #{tpu_custom_call.1} parent=11 // pred_fallthru
          _
        // Predicated region
        $region29: #{tpu_custom_call.1} parent=11 // pred_check
          %p552 = pneg %p199
        $region30: #{tpu_custom_call.1} parent=11 // pred_check_branch
          %554 = sbr.rel (%p552) target = $region32
        $region31: #{tpu_custom_call.1} parent=11 // pred_region
          %556 = vsyncadd [#allocation10], 0
          %s557 = sshll.u32 %s6, 4
          %s558 = int_to_ptr.hbm [resolvable:$true] %s557
          %s559 = sshll.u32 [#allocation11], 4
          %s560 = int_to_ptr.vmem [resolvable:$true] %s559
          %565 = dma.hbm_to_vmem [thread:$0]  %s558, 512, %s560, [#allocation10], 128, 128, 8
        $region32: #{tpu_custom_call.1} parent=11 // pred_fallthru
          _
        // Predicated region
        $region33: #{tpu_custom_call.1} parent=11 // pred_check
          %p566 = pneg %p220
        $region34: #{tpu_custom_call.1} parent=11 // pred_check_branch
          %568 = sbr.rel (%p566) target = $region36
        $region35: #{tpu_custom_call.1} parent=11 // pred_region
          _
        $region36: #{tpu_custom_call.1} parent=11 // pred_fallthru
          _
        // Predicated region
        $region37: #{tpu_custom_call.1} parent=11 // pred_check
          %p569 = pneg %p241
        $region38: #{tpu_custom_call.1} parent=11 // pred_check_branch
          %571 = sbr.rel (%p569) target = $region40
        $region39: #{tpu_custom_call.1} parent=11 // pred_region
          _
        $region40: #{tpu_custom_call.1} parent=11 // pred_fallthru
          _
        // Predicated region
        $region41: #{tpu_custom_call.1} parent=11 // pred_check
          %p572 = pneg %p262
        $region42: #{tpu_custom_call.1} parent=11 // pred_check_branch
          %574 = sbr.rel (%p572) target = $region44
        $region43: #{tpu_custom_call.1} parent=11 // pred_region
          _
        $region44: #{tpu_custom_call.1} parent=11 // pred_fallthru
          _
        // Predicated region
        $region45: #{tpu_custom_call.1} parent=11 // pred_check
          %p575 = pneg %p283
        $region46: #{tpu_custom_call.1} parent=11 // pred_check_branch
          %577 = sbr.rel (%p575) target = $region48
        $region47: #{tpu_custom_call.1} parent=11 // pred_region
          %579 = vsyncadd [#allocation13], 0
          %s580 = sshll.u32 %s10, 4
          %s581 = int_to_ptr.hbm [resolvable:$true] %s580
          %s582 = sshll.u32 [#allocation12], 4
          %s583 = int_to_ptr.vmem [resolvable:$true] %s582
          %588 = dma.hbm_to_vmem [thread:$0]  %s581, 2048, %s583, [#allocation13], 128, 128, 8
        $region48: #{tpu_custom_call.1} parent=11 // pred_fallthru
          _
        // Predicated region
        $region49: #{tpu_custom_call.1} parent=11 // pred_check
          %p589 = pneg %p304
        $region50: #{tpu_custom_call.1} parent=11 // pred_check_branch
          %591 = sbr.rel (%p589) target = $region52
        $region51: #{tpu_custom_call.1} parent=11 // pred_region
          %593 = vsyncadd [#allocation13], 0
          %s594 = sshll.u32 %s11, 4
          %s595 = int_to_ptr.hbm [resolvable:$true] %s594
          %s596 = sshll.u32 [#allocation14], 4
          %s597 = int_to_ptr.vmem [resolvable:$true] %s596
          %602 = dma.hbm_to_vmem [thread:$0]  %s595, 2048, %s597, [#allocation13], 128, 128, 8
        $region52: #{tpu_custom_call.1} parent=11 // pred_fallthru
          _
        // Predicated region
        $region53: #{tpu_custom_call.1} parent=11 // pred_check
          %p603 = pneg %p325
        $region54: #{tpu_custom_call.1} parent=11 // pred_check_branch
          %605 = sbr.rel (%p603) target = $region56
        $region55: #{tpu_custom_call.1} parent=11 // pred_region
          _
        $region56: #{tpu_custom_call.1} parent=11 // pred_fallthru
          _
        // Predicated region
        $region57: #{tpu_custom_call.1} parent=11 // pred_check
          %p606 = pneg %p346
        $region58: #{tpu_custom_call.1} parent=11 // pred_check_branch
          %608 = sbr.rel (%p606) target = $region60
        $region59: #{tpu_custom_call.1} parent=11 // pred_region
          %610 = vsyncadd [#allocation16], 0
          %s611 = sshll.u32 %s13, 4
          %s612 = int_to_ptr.hbm [resolvable:$true] %s611
          %s613 = sshll.u32 [#allocation15], 4
          %s614 = int_to_ptr.vmem [resolvable:$true] %s613
          %619 = dma.hbm_to_vmem [thread:$0]  %s612, 2048, %s614, [#allocation16], 128, 128, 8
        $region60: #{tpu_custom_call.1} parent=11 // pred_fallthru
          _
        // Predicated region
        $region61: #{tpu_custom_call.1} parent=11 // pred_check
          %p620 = pneg %p367
        $region62: #{tpu_custom_call.1} parent=11 // pred_check_branch
          %622 = sbr.rel (%p620) target = $region64
        $region63: #{tpu_custom_call.1} parent=11 // pred_region
          _
        $region64: #{tpu_custom_call.1} parent=11 // pred_fallthru
          _
        // Predicated region
        $region65: #{tpu_custom_call.1} parent=11 // pred_check
          %p623 = pneg %p388
        $region66: #{tpu_custom_call.1} parent=11 // pred_check_branch
          %625 = sbr.rel (%p623) target = $region68
        $region67: #{tpu_custom_call.1} parent=11 // pred_region
          _
        $region68: #{tpu_custom_call.1} parent=11 // pred_fallthru
          _
        // Predicated region
        $region69: #{tpu_custom_call.1} parent=11 // pred_check
          %p626 = pneg %p409
        $region70: #{tpu_custom_call.1} parent=11 // pred_check_branch
          %628 = sbr.rel (%p626) target = $region72
        $region71: #{tpu_custom_call.1} parent=11 // pred_region
          _
        $region72: #{tpu_custom_call.1} parent=11 // pred_fallthru
          _
        // Predicated region
        $region73: #{tpu_custom_call.1} parent=11 // pred_check
          %p629 = pneg %p430
        $region74: #{tpu_custom_call.1} parent=11 // pred_check_branch
          %631 = sbr.rel (%p629) target = $region76
        $region75: #{tpu_custom_call.1} parent=11 // pred_region
          %633 = vsyncadd [#allocation16], 0
          %s634 = sshll.u32 %s17, 4
          %s635 = int_to_ptr.hbm [resolvable:$true] %s634
          %s636 = sshll.u32 [#allocation17], 4
          %s637 = int_to_ptr.vmem [resolvable:$true] %s636
          %642 = dma.hbm_to_vmem [thread:$0]  %s635, 2048, %s637, [#allocation16], 128, 128, 8
        $region76: #{tpu_custom_call.1} parent=11 // pred_fallthru
          _
        // Predicated region
        $region77: #{tpu_custom_call.1} parent=11 // pred_check
          %p643 = pneg %p451
        $region78: #{tpu_custom_call.1} parent=11 // pred_check_branch
          %645 = sbr.rel (%p643) target = $region80
        $region79: #{tpu_custom_call.1} parent=11 // pred_region
          _
        $region80: #{tpu_custom_call.1} parent=11 // pred_fallthru
          _
      $region12: #{tpu_custom_call.1} parent=5 // pred_fallthru
        _
      %p646 = scmp.lt.s32.totalorder %s42, 2
      // Predicated region
      $region81: #{tpu_custom_call.1} parent=5 // pred_check
        %p647 = pneg %p646
      $region82: #{tpu_custom_call.1} parent=5 // pred_check_branch
        %649 = sbr.rel (%p647) target = $region84
      $region83: #{tpu_custom_call.1} parent=5 // pred_region
        // Predicated region
        $region85: #{tpu_custom_call.1} parent=83 // pred_check
          %p650 = pneg %p62
        $region86: #{tpu_custom_call.1} parent=83 // pred_check_branch
          %652 = sbr.rel (%p650) target = $region88
        $region87: #{tpu_custom_call.1} parent=83 // pred_region
          %s653 = sand.u32 %s52, 1
          %s654 = scalar_lea.sflag [#allocation4], %s653
          %s655 = sand.u32 %s52, 1
          %s656 = smul.addr %s655, 32
          %s657 = scalar_lea.vmem [#allocation3], %s656
          %s658 = smul.u32 4, %s42
          %660 = vsyncadd %s654, 0
          %s661 = smul.addr %s658, 8
          %s662 = scalar_lea.hbm %s0, %s661
          %s663 = sshll.u32 %s662, 4
          %s664 = int_to_ptr.hbm [resolvable:$true] %s663
          %s665 = sshll.u32 %s657, 4
          %s666 = int_to_ptr.vmem [resolvable:$true] %s665
          %671 = dma.hbm_to_vmem [thread:$0]  %s664, 512, %s666, %s654, 128, 128, 8
        $region88: #{tpu_custom_call.1} parent=83 // pred_fallthru
          _
        // Predicated region
        $region89: #{tpu_custom_call.1} parent=83 // pred_check
          %p672 = pneg %p88
        $region90: #{tpu_custom_call.1} parent=83 // pred_check_branch
          %674 = sbr.rel (%p672) target = $region92
        $region91: #{tpu_custom_call.1} parent=83 // pred_region
          %s675 = sand.u32 %s42, 1
          %s676 = scalar_lea.sflag [#allocation7], %s675
          %s677 = sand.u32 %s78, 1
          %s678 = smul.addr %s677, 64
          %s679 = scalar_lea.vmem [#allocation6], %s678
          %s680 = smul.u32 4, %s42
          %682 = vsyncadd %s676, 0
          %s683 = smul.addr %s680, 2
          %s684 = smul.addr %s683, 8
          %s685 = scalar_lea.hbm %s1, %s684
          %s686 = sshll.u32 %s685, 4
          %s687 = int_to_ptr.hbm [resolvable:$true] %s686
          %s688 = sshll.u32 %s679, 4
          %s689 = int_to_ptr.vmem [resolvable:$true] %s688
          %694 = dma.hbm_to_vmem [thread:$0]  %s687, 1024, %s689, %s676, 128, 128, 8
        $region92: #{tpu_custom_call.1} parent=83 // pred_fallthru
          _
      $region84: #{tpu_custom_call.1} parent=5 // pred_fallthru
        _
      %p695 = scmp.le.s32.totalorder 1, %s42
      %p696 = scmp.lt.s32.totalorder %s42, 3
      %p697 = pnand %p695, %p696
      %p698 = pneg %p697
      // Predicated region
      $region93: #{tpu_custom_call.1} parent=5 // pred_check
        _
      $region94: #{tpu_custom_call.1} parent=5 // pred_check_branch
        %700 = sbr.rel (%p697) target = $region96
      $region95: #{tpu_custom_call.1} parent=5 // pred_region
        %s701 = ssub.s32 %s42, 1
        %s702 = sand.u32 %s55, 1
        %s703 = scalar_lea.sflag [#allocation4], %s702
        %s704 = sand.u32 %s55, 1
        %s705 = smul.addr %s704, 32
        %s706 = scalar_lea.vmem [#allocation3], %s705
        // Predicated region
        $region97: #{tpu_custom_call.1} parent=95 // pred_check
          %p707 = pneg %p68
        $region98: #{tpu_custom_call.1} parent=95 // pred_check_branch
          %709 = sbr.rel (%p707) target = $region100
        $region99: #{tpu_custom_call.1} parent=95 // pred_region
          %711 = dma.done %s703, 512
        $region100: #{tpu_custom_call.1} parent=95 // pred_fallthru
          _
        %s712 = sand.u32 %s47, 1
        %s713 = scalar_lea.sflag [#allocation7], %s712
        %s714 = sand.u32 %s81, 1
        %s715 = smul.addr %s714, 64
        %s716 = scalar_lea.vmem [#allocation6], %s715
        // Predicated region
        $region101: #{tpu_custom_call.1} parent=95 // pred_check
          %p717 = pneg %p94
        $region102: #{tpu_custom_call.1} parent=95 // pred_check_branch
          %719 = sbr.rel (%p717) target = $region104
        $region103: #{tpu_custom_call.1} parent=95 // pred_region
          %721 = dma.done %s713, 1024
        $region104: #{tpu_custom_call.1} parent=95 // pred_fallthru
          _
        // Predicated region
        $region105: #{tpu_custom_call.1} parent=95 // pred_check
          %p722 = pneg %p115
        $region106: #{tpu_custom_call.1} parent=95 // pred_check_branch
          %724 = sbr.rel (%p722) target = $region108
        $region107: #{tpu_custom_call.1} parent=95 // pred_region
          %726 = dma.done [#allocation7], 512
        $region108: #{tpu_custom_call.1} parent=95 // pred_fallthru
          _
        // Predicated region
        $region109: #{tpu_custom_call.1} parent=95 // pred_check
          %p727 = pneg %p157
        $region110: #{tpu_custom_call.1} parent=95 // pred_check_branch
          %729 = sbr.rel (%p727) target = $region112
        $region111: #{tpu_custom_call.1} parent=95 // pred_region
          %731 = dma.done [#allocation10], 512
        $region112: #{tpu_custom_call.1} parent=95 // pred_fallthru
          _
        // Predicated region
        $region113: #{tpu_custom_call.1} parent=95 // pred_check
          %p732 = pneg %p199
        $region114: #{tpu_custom_call.1} parent=95 // pred_check_branch
          %734 = sbr.rel (%p732) target = $region116
        $region115: #{tpu_custom_call.1} parent=95 // pred_region
          %736 = dma.done [#allocation10], 512
        $region116: #{tpu_custom_call.1} parent=95 // pred_fallthru
          _
        // Predicated region
        $region117: #{tpu_custom_call.1} parent=95 // pred_check
          %p737 = pneg %p283
        $region118: #{tpu_custom_call.1} parent=95 // pred_check_branch
          %739 = sbr.rel (%p737) target = $region120
        $region119: #{tpu_custom_call.1} parent=95 // pred_region
          %741 = dma.done [#allocation13], 2048
        $region120: #{tpu_custom_call.1} parent=95 // pred_fallthru
          _
        // Predicated region
        $region121: #{tpu_custom_call.1} parent=95 // pred_check
          %p742 = pneg %p304
        $region122: #{tpu_custom_call.1} parent=95 // pred_check_branch
          %744 = sbr.rel (%p742) target = $region124
        $region123: #{tpu_custom_call.1} parent=95 // pred_region
          %746 = dma.done [#allocation13], 2048
        $region124: #{tpu_custom_call.1} parent=95 // pred_fallthru
          _
        // Predicated region
        $region125: #{tpu_custom_call.1} parent=95 // pred_check
          %p747 = pneg %p346
        $region126: #{tpu_custom_call.1} parent=95 // pred_check_branch
          %749 = sbr.rel (%p747) target = $region128
        $region127: #{tpu_custom_call.1} parent=95 // pred_region
          %751 = dma.done [#allocation16], 2048
        $region128: #{tpu_custom_call.1} parent=95 // pred_fallthru
          _
        // Predicated region
        $region129: #{tpu_custom_call.1} parent=95 // pred_check
          %p752 = pneg %p430
        $region130: #{tpu_custom_call.1} parent=95 // pred_check_branch
          %754 = sbr.rel (%p752) target = $region132
        $region131: #{tpu_custom_call.1} parent=95 // pred_region
          %756 = dma.done [#allocation16], 2048
        $region132: #{tpu_custom_call.1} parent=95 // pred_fallthru
          _
        %s757 = sand.u32 %s55, 1
        %s758 = scalar_lea.sflag [#allocation4], %s757
        %s759 = sand.u32 %s55, 1
        %s760 = smul.addr %s759, 32
        %s761 = scalar_lea.vmem [#allocation3], %s760
        %p762 = pneg %p68
        %p763 = pneg %p65
        %s764 = sand.u32 %s47, 1
        %s765 = scalar_lea.sflag [#allocation7], %s764
        %s766 = sand.u32 %s81, 1
        %s767 = smul.addr %s766, 64
        %s768 = scalar_lea.vmem [#allocation6], %s767
        %p769 = pneg %p94
        %p770 = pneg %p91
        %p771 = pneg %p115
        %p772 = pneg %p112
        %p773 = pneg %p136
        %p774 = pneg %p133
        %p775 = pneg %p157
        %p776 = pneg %p154
        %p777 = pneg %p178
        %p778 = pneg %p175
        %p779 = pneg %p199
        %p780 = pneg %p196
        %p781 = pneg %p220
        %p782 = pneg %p217
        %p783 = pneg %p241
        %p784 = pneg %p238
        %p785 = pneg %p262
        %p786 = pneg %p259
        %p787 = pneg %p283
        %p788 = pneg %p280
        %p789 = pneg %p304
        %p790 = pneg %p301
        %p791 = pneg %p325
        %p792 = pneg %p322
        %p793 = pneg %p346
        %p794 = pneg %p343
        %p795 = pneg %p367
        %p796 = pneg %p364
        %p797 = pneg %p388
        %p798 = pneg %p385
        %p799 = pneg %p409
        %p800 = pneg %p406
        %p801 = pneg %p430
        %p802 = pneg %p427
        %p803 = pneg %p451
        %p804 = pneg %p448
        %p805 = pneg %p477
        %p806 = pneg %p474
        %s807 = sand.u32 %s464, 1
        %s808 = scalar_lea.sflag [#allocation5], %s807
        %s809 = sand.u32 %s464, 1
        %s810 = smul.addr %s809, 8
        %s811 = scalar_lea.vmem [#allocation18], %s810
        %p812 = pneg %p503
        %p813 = pneg %p500
        %s814 = sand.u32 %s490, 1
        %s815 = scalar_lea.sflag [#allocation20], %s814
        %s816 = sand.u32 %s490, 1
        %s817 = smul.addr %s816, 8
        %s818 = scalar_lea.vmem [#allocation19], %s817
        %s819 = smul.u32 4, %s47
        %s820 = smul.u32 4, %s47
        %v821 = vld [vmem:[%s706] sm:$0xff]
        %v822 = vld [vmem:[%s706 + $0x8] sm:$0xff]
        %v823 = vld [vmem:[%s706 + $0x10] sm:$0xff]
        %v824 = vld [vmem:[%s706 + $0x18] sm:$0xff]
        %v825 = vld [vmem:[%s716] sm:$0xff]
        %v826 = vld [vmem:[%s716 + $0x8] sm:$0xff]
        %v827 = vld [vmem:[%s716 + $0x10] sm:$0xff]
        %v828 = vld [vmem:[%s716 + $0x18] sm:$0xff]
        %v829 = vld [vmem:[%s716 + $0x20] sm:$0xff]
        %v830 = vld [vmem:[%s716 + $0x28] sm:$0xff]
        %v831 = vld [vmem:[%s716 + $0x30] sm:$0xff]
        %v832 = vld [vmem:[%s716 + $0x38] sm:$0xff]
        %v833 = vld [vmem:[#allocation8] sm:$0xff]
        %v834 = vld [vmem:[#allocation8 + $0x8] sm:$0xff]
        %v835 = vld [vmem:[#allocation8 + $0x10] sm:$0xff]
        %v836 = vld [vmem:[#allocation8 + $0x18] sm:$0xff]
        %v837 = vld [vmem:[%s3] sm:$0x1]
        %v839 = vperm.slane %v837, 0
        %vm841 = vcmask 261120
        %v843 = vsel %vm841, %v821, 0
        %v846 = vsel %vm841, %v822, 0
        %v849 = vsel %vm841, %v823, 0
        %v852 = vsel %vm841, %v824, 0
        %854 = vmatpush.msra.mxu0 0.0
        %855 = vmatpush.msra.mxu0 0.0
        %856 = vmatpush.msra.mxu0 0.0
        %857 = vmatpush.msra.mxu0 0.0
        %858 = vmatpush.msra.mxu0 0.0
        %859 = vmatpush.msra.mxu0 0.0
        %860 = vmatpush.msra.mxu0 0.0
        %861 = vmatpush.msra.mxu0 0.0
        %862 = vmatpush.msra.mxu0 0.0
        %863 = vmatpush.msra.mxu0 0.0
        %864 = vmatpush.msra.mxu0 0.0
        %865 = vmatpush.msra.mxu0 0.0
        %866 = vmatpush.msra.mxu0 %v836
        %867 = vmatpush.msra.mxu0 %v835
        %868 = vmatpush.msra.mxu0 %v834
        %869 = vmatpush.msra.mxu0 %v833
        %870 = vmatmul.f32.gmra.mxu0 %v843
        %v871 = vpop.f32.mrf.mxu0
        %v872 = vadd.f32 %v839, %v871
        %873 = vmatmul.f32.gmra.mxu0 %v846
        %v874 = vpop.f32.mrf.mxu0
        %v875 = vadd.f32 %v839, %v874
        %876 = vmatmul.f32.gmra.mxu0 %v849
        %v877 = vpop.f32.mrf.mxu0
        %v878 = vadd.f32 %v839, %v877
        %879 = vmatmul.f32.gmra.mxu0 %v852
        %v880 = vpop.f32.mrf.mxu0
        %v881 = vadd.f32 %v839, %v880
        %882 = vdwg.mxu0
        %v883 = vld [vmem:[#allocation9] sm:$0xff]
        %v884 = vld [vmem:[#allocation9 + $0x8] sm:$0xff]
        %v885 = vld [vmem:[#allocation9 + $0x10] sm:$0xff]
        %v886 = vld [vmem:[#allocation9 + $0x18] sm:$0xff]
        %v887 = vld [vmem:[%s5] sm:$0x1]
        %v889 = vperm.slane %v887, 0
        %v892 = vsel %vm841, %v825, 0
        %v895 = vsel %vm841, %v826, 0
        %v898 = vsel %vm841, %v827, 0
        %v901 = vsel %vm841, %v828, 0
        %v904 = vsel %vm841, %v829, 0
        %v907 = vsel %vm841, %v830, 0
        %v910 = vsel %vm841, %v831, 0
        %v913 = vsel %vm841, %v832, 0
        %915 = vmatpush.msra.mxu0 0.0
        %916 = vmatpush.msra.mxu0 0.0
        %917 = vmatpush.msra.mxu0 0.0
        %918 = vmatpush.msra.mxu0 0.0
        %919 = vmatpush.msra.mxu0 0.0
        %920 = vmatpush.msra.mxu0 0.0
        %921 = vmatpush.msra.mxu0 0.0
        %922 = vmatpush.msra.mxu0 0.0
        %923 = vmatpush.msra.mxu0 0.0
        %924 = vmatpush.msra.mxu0 0.0
        %925 = vmatpush.msra.mxu0 0.0
        %926 = vmatpush.msra.mxu0 0.0
        %927 = vmatpush.msra.mxu0 %v886
        %928 = vmatpush.msra.mxu0 %v885
        %929 = vmatpush.msra.mxu0 %v884
        %930 = vmatpush.msra.mxu0 %v883
        %931 = vmatmul.f32.gmra.mxu0 %v892
        %v932 = vpop.f32.mrf.mxu0
        %v933 = vadd.f32 %v889, %v932
        %934 = vmatmul.f32.gmra.mxu0 %v895
        %v935 = vpop.f32.mrf.mxu0
        %v936 = vadd.f32 %v889, %v935
        %937 = vmatmul.f32.gmra.mxu0 %v898
        %v938 = vpop.f32.mrf.mxu0
        %v939 = vadd.f32 %v889, %v938
        %940 = vmatmul.f32.gmra.mxu0 %v901
        %v941 = vpop.f32.mrf.mxu0
        %v942 = vadd.f32 %v889, %v941
        %943 = vmatmul.f32.gmra.mxu0 %v904
        %v944 = vpop.f32.mrf.mxu0
        %v945 = vadd.f32 %v889, %v944
        %946 = vmatmul.f32.gmra.mxu0 %v907
        %v947 = vpop.f32.mrf.mxu0
        %v948 = vadd.f32 %v889, %v947
        %949 = vmatmul.f32.gmra.mxu0 %v910
        %v950 = vpop.f32.mrf.mxu0
        %v951 = vadd.f32 %v889, %v950
        %952 = vmatmul.f32.gmra.mxu0 %v913
        %v953 = vpop.f32.mrf.mxu0
        %v954 = vadd.f32 %v889, %v953
        %955 = vdwg.mxu0
        %v957 = vsel %vm841, %v872, 0
        %v960 = vsel %vm841, %v933, 0
        %v963 = vsel %vm841, %v936, 0
        %965 = vmatpush.xpose.msra.mxu0 0.0
        %966 = vmatpush.xpose.msra.mxu0 0.0
        %967 = vmatpush.xpose.msra.mxu0 0.0
        %968 = vmatpush.xpose.msra.mxu0 0.0
        %969 = vmatpush.xpose.msra.mxu0 0.0
        %970 = vmatpush.xpose.msra.mxu0 0.0
        %971 = vmatpush.xpose.msra.mxu0 0.0
        %972 = vmatpush.xpose.msra.mxu0 0.0
        %973 = vmatpush.xpose.msra.mxu0 0.0
        %974 = vmatpush.xpose.msra.mxu0 0.0
        %975 = vmatpush.xpose.msra.mxu0 0.0
        %976 = vmatpush.xpose.msra.mxu0 0.0
        %977 = vmatpush.xpose.msra.mxu0 0.0
        %978 = vmatpush.xpose.msra.mxu0 0.0
        %979 = vmatpush.xpose.msra.mxu0 %v963
        %980 = vmatpush.xpose.msra.mxu0 %v960
        %981 = vmatmul.f32.gmra.mxu0 %v957
        %v982 = vpop.f32.mrf.mxu0
        %v983 = vadd.f32 0.0, %v982
        %984 = vdwg.mxu0
        %v986 = vsel %vm841, %v875, 0
        %v989 = vsel %vm841, %v939, 0
        %v992 = vsel %vm841, %v942, 0
        %994 = vmatpush.xpose.msra.mxu0 0.0
        %995 = vmatpush.xpose.msra.mxu0 0.0
        %996 = vmatpush.xpose.msra.mxu0 0.0
        %997 = vmatpush.xpose.msra.mxu0 0.0
        %998 = vmatpush.xpose.msra.mxu0 0.0
        %999 = vmatpush.xpose.msra.mxu0 0.0
        %1000 = vmatpush.xpose.msra.mxu0 0.0
        %1001 = vmatpush.xpose.msra.mxu0 0.0
        %1002 = vmatpush.xpose.msra.mxu0 0.0
        %1003 = vmatpush.xpose.msra.mxu0 0.0
        %1004 = vmatpush.xpose.msra.mxu0 0.0
        %1005 = vmatpush.xpose.msra.mxu0 0.0
        %1006 = vmatpush.xpose.msra.mxu0 0.0
        %1007 = vmatpush.xpose.msra.mxu0 0.0
        %1008 = vmatpush.xpose.msra.mxu0 %v992
        %1009 = vmatpush.xpose.msra.mxu0 %v989
        %1010 = vmatmul.f32.gmra.mxu0 %v986
        %v1011 = vpop.f32.mrf.mxu0
        %v1012 = vadd.f32 0.0, %v1011
        %1013 = vdwg.mxu0
        %v1015 = vsel %vm841, %v878, 0
        %v1018 = vsel %vm841, %v945, 0
        %v1021 = vsel %vm841, %v948, 0
        %1023 = vmatpush.xpose.msra.mxu0 0.0
        %1024 = vmatpush.xpose.msra.mxu0 0.0
        %1025 = vmatpush.xpose.msra.mxu0 0.0
        %1026 = vmatpush.xpose.msra.mxu0 0.0
        %1027 = vmatpush.xpose.msra.mxu0 0.0
        %1028 = vmatpush.xpose.msra.mxu0 0.0
        %1029 = vmatpush.xpose.msra.mxu0 0.0
        %1030 = vmatpush.xpose.msra.mxu0 0.0
        %1031 = vmatpush.xpose.msra.mxu0 0.0
        %1032 = vmatpush.xpose.msra.mxu0 0.0
        %1033 = vmatpush.xpose.msra.mxu0 0.0
        %1034 = vmatpush.xpose.msra.mxu0 0.0
        %1035 = vmatpush.xpose.msra.mxu0 0.0
        %1036 = vmatpush.xpose.msra.mxu0 0.0
        %1037 = vmatpush.xpose.msra.mxu0 %v1021
        %1038 = vmatpush.xpose.msra.mxu0 %v1018
        %1039 = vmatmul.f32.gmra.mxu0 %v1015
        %v1040 = vpop.f32.mrf.mxu0
        %v1041 = vadd.f32 0.0, %v1040
        %1042 = vdwg.mxu0
        %v1044 = vsel %vm841, %v881, 0
        %v1047 = vsel %vm841, %v951, 0
        %v1050 = vsel %vm841, %v954, 0
        %1052 = vmatpush.xpose.msra.mxu0 0.0
        %1053 = vmatpush.xpose.msra.mxu0 0.0
        %1054 = vmatpush.xpose.msra.mxu0 0.0
        %1055 = vmatpush.xpose.msra.mxu0 0.0
        %1056 = vmatpush.xpose.msra.mxu0 0.0
        %1057 = vmatpush.xpose.msra.mxu0 0.0
        %1058 = vmatpush.xpose.msra.mxu0 0.0
        %1059 = vmatpush.xpose.msra.mxu0 0.0
        %1060 = vmatpush.xpose.msra.mxu0 0.0
        %1061 = vmatpush.xpose.msra.mxu0 0.0
        %1062 = vmatpush.xpose.msra.mxu0 0.0
        %1063 = vmatpush.xpose.msra.mxu0 0.0
        %1064 = vmatpush.xpose.msra.mxu0 0.0
        %1065 = vmatpush.xpose.msra.mxu0 0.0
        %1066 = vmatpush.xpose.msra.mxu0 %v1050
        %1067 = vmatpush.xpose.msra.mxu0 %v1047
        %1068 = vmatmul.f32.gmra.mxu0 %v1044
        %v1069 = vpop.f32.mrf.mxu0
        %v1070 = vadd.f32 0.0, %v1069
        %1071 = vdwg.mxu0
        %vm1072 = vcmask 130048
        %v1073 = vsel %vm1072, %v983, -inf
        %1074 = vmax.xlane.f32.xlu0 %v1073
        %v1075 = vpop.xlane.xlu0 %1074
        %v1076 = vsel %vm1072, %v1012, -inf
        %1077 = vmax.xlane.f32.xlu0 %v1076
        %v1078 = vpop.xlane.xlu0 %1077
        %v1079 = vsel %vm1072, %v1041, -inf
        %1080 = vmax.xlane.f32.xlu0 %v1079
        %v1081 = vpop.xlane.xlu0 %1080
        %v1082 = vsel %vm1072, %v1070, -inf
        %1083 = vmax.xlane.f32.xlu0 %v1082
        %v1084 = vpop.xlane.xlu0 %1083
        %v1085 = vsub.f32 %v983, %v1075
        %v1086 = vsub.f32 %v1012, %v1078
        %v1087 = vsub.f32 %v1041, %v1081
        %v1088 = vsub.f32 %v1070, %v1084
        %v1089 = vmul.f32 %v1085, 1.442695
        %v1090 = vpow.pop %v1089
        %v1091 = vmul.f32 %v1086, 1.442695
        %v1092 = vpow.pop %v1091
        %v1093 = vmul.f32 %v1087, 1.442695
        %v1094 = vpow.pop %v1093
        %v1095 = vmul.f32 %v1088, 1.442695
        %v1096 = vpow.pop %v1095
        %v1097 = vsel %vm1072, %v1090, 0.0
        %1098 = vadd.xlane.f32.xlu0 %v1097
        %v1099 = vpop.xlane.xlu0 %1098
        %v1100 = vsel %vm1072, %v1092, 0.0
        %1101 = vadd.xlane.f32.xlu0 %v1100
        %v1102 = vpop.xlane.xlu0 %1101
        %v1103 = vsel %vm1072, %v1094, 0.0
        %1104 = vadd.xlane.f32.xlu0 %v1103
        %v1105 = vpop.xlane.xlu0 %1104
        %v1106 = vsel %vm1072, %v1096, 0.0
        %1107 = vadd.xlane.f32.xlu0 %v1106
        %v1108 = vpop.xlane.xlu0 %1107
        %v1109 = vrcp.pop %v1099
        %v1110 = vrcp.pop %v1102
        %v1111 = vrcp.pop %v1105
        %v1112 = vrcp.pop %v1108
        %v1113 = vmul.f32 %v1090, %v1109
        %v1114 = vmul.f32 %v1092, %v1110
        %v1115 = vmul.f32 %v1094, %v1111
        %v1116 = vmul.f32 %v1096, %v1112
        %1117 = vrot.lane.b32.xlu0 %v933, 96
        %v1118 = vpop.permute.xlu0 %1117
        %1119 = vrot.lane.b32.xlu0 %v936, 96
        %v1120 = vpop.permute.xlu0 %1119
        %v1124 = vsel %vm1072, %v1113, 0
        %1126 = vmatpush.msra.mxu0 0.0
        %1127 = vmatpush.msra.mxu0 0.0
        %1128 = vmatpush.msra.mxu0 0.0
        %1129 = vmatpush.msra.mxu0 0.0
        %1130 = vmatpush.msra.mxu0 0.0
        %1131 = vmatpush.msra.mxu0 0.0
        %1132 = vmatpush.msra.mxu0 0.0
        %1133 = vmatpush.msra.mxu0 0.0
        %1134 = vmatpush.msra.mxu0 0.0
        %1135 = vmatpush.msra.mxu0 0.0
        %1136 = vmatpush.msra.mxu0 0.0
        %1137 = vmatpush.msra.mxu0 0.0
        %1138 = vmatpush.msra.mxu0 0.0
        %1139 = vmatpush.msra.mxu0 0.0
        %1140 = vmatpush.msra.mxu0 %v1120
        %1141 = vmatpush.msra.mxu0 %v1118
        %1142 = vmatmul.f32.gmra.mxu0 %v1124
        %v1143 = vpop.f32.mrf.mxu0
        %v1144 = vadd.f32 0.0, %v1143
        %1145 = vdwg.mxu0
        %1146 = vrot.lane.b32.xlu0 %v939, 96
        %v1147 = vpop.permute.xlu0 %1146
        %1148 = vrot.lane.b32.xlu0 %v942, 96
        %v1149 = vpop.permute.xlu0 %1148
        %v1153 = vsel %vm1072, %v1114, 0
        %1155 = vmatpush.msra.mxu0 0.0
        %1156 = vmatpush.msra.mxu0 0.0
        %1157 = vmatpush.msra.mxu0 0.0
        %1158 = vmatpush.msra.mxu0 0.0
        %1159 = vmatpush.msra.mxu0 0.0
        %1160 = vmatpush.msra.mxu0 0.0
        %1161 = vmatpush.msra.mxu0 0.0
        %1162 = vmatpush.msra.mxu0 0.0
        %1163 = vmatpush.msra.mxu0 0.0
        %1164 = vmatpush.msra.mxu0 0.0
        %1165 = vmatpush.msra.mxu0 0.0
        %1166 = vmatpush.msra.mxu0 0.0
        %1167 = vmatpush.msra.mxu0 0.0
        %1168 = vmatpush.msra.mxu0 0.0
        %1169 = vmatpush.msra.mxu0 %v1149
        %1170 = vmatpush.msra.mxu0 %v1147
        %1171 = vmatmul.f32.gmra.mxu0 %v1153
        %v1172 = vpop.f32.mrf.mxu0
        %v1173 = vadd.f32 0.0, %v1172
        %1174 = vdwg.mxu0
        %1175 = vrot.lane.b32.xlu0 %v945, 96
        %v1176 = vpop.permute.xlu0 %1175
        %1177 = vrot.lane.b32.xlu0 %v948, 96
        %v1178 = vpop.permute.xlu0 %1177
        %v1182 = vsel %vm1072, %v1115, 0
        %1184 = vmatpush.msra.mxu0 0.0
        %1185 = vmatpush.msra.mxu0 0.0
        %1186 = vmatpush.msra.mxu0 0.0
        %1187 = vmatpush.msra.mxu0 0.0
        %1188 = vmatpush.msra.mxu0 0.0
        %1189 = vmatpush.msra.mxu0 0.0
        %1190 = vmatpush.msra.mxu0 0.0
        %1191 = vmatpush.msra.mxu0 0.0
        %1192 = vmatpush.msra.mxu0 0.0
        %1193 = vmatpush.msra.mxu0 0.0
        %1194 = vmatpush.msra.mxu0 0.0
        %1195 = vmatpush.msra.mxu0 0.0
        %1196 = vmatpush.msra.mxu0 0.0
        %1197 = vmatpush.msra.mxu0 0.0
        %1198 = vmatpush.msra.mxu0 %v1178
        %1199 = vmatpush.msra.mxu0 %v1176
        %1200 = vmatmul.f32.gmra.mxu0 %v1182
        %v1201 = vpop.f32.mrf.mxu0
        %v1202 = vadd.f32 0.0, %v1201
        %1203 = vdwg.mxu0
        %1204 = vrot.lane.b32.xlu0 %v951, 96
        %v1205 = vpop.permute.xlu0 %1204
        %1206 = vrot.lane.b32.xlu0 %v954, 96
        %v1207 = vpop.permute.xlu0 %1206
        %v1211 = vsel %vm1072, %v1116, 0
        %1213 = vmatpush.msra.mxu0 0.0
        %1214 = vmatpush.msra.mxu0 0.0
        %1215 = vmatpush.msra.mxu0 0.0
        %1216 = vmatpush.msra.mxu0 0.0
        %1217 = vmatpush.msra.mxu0 0.0
        %1218 = vmatpush.msra.mxu0 0.0
        %1219 = vmatpush.msra.mxu0 0.0
        %1220 = vmatpush.msra.mxu0 0.0
        %1221 = vmatpush.msra.mxu0 0.0
        %1222 = vmatpush.msra.mxu0 0.0
        %1223 = vmatpush.msra.mxu0 0.0
        %1224 = vmatpush.msra.mxu0 0.0
        %1225 = vmatpush.msra.mxu0 0.0
        %1226 = vmatpush.msra.mxu0 0.0
        %1227 = vmatpush.msra.mxu0 %v1207
        %1228 = vmatpush.msra.mxu0 %v1205
        %1229 = vmatmul.f32.gmra.mxu0 %v1211
        %v1230 = vpop.f32.mrf.mxu0
        %v1231 = vadd.f32 0.0, %v1230
        %1232 = vdwg.mxu0
        %v1233 = vld [vmem:[#allocation11] sm:$0xff]
        %v1234 = vld [vmem:[#allocation11 + $0x8] sm:$0xff]
        %v1235 = vld [vmem:[#allocation11 + $0x10] sm:$0xff]
        %v1236 = vld [vmem:[#allocation11 + $0x18] sm:$0xff]
        %v1237 = vld [vmem:[%s7] sm:$0x1]
        %v1239 = vperm.slane %v1237, 0
        %v1242 = vsel %vm841, %v1144, 0
        %v1245 = vsel %vm841, %v1173, 0
        %v1248 = vsel %vm841, %v1202, 0
        %v1251 = vsel %vm841, %v1231, 0
        %1253 = vmatpush.msra.mxu0 0.0
        %1254 = vmatpush.msra.mxu0 0.0
        %1255 = vmatpush.msra.mxu0 0.0
        %1256 = vmatpush.msra.mxu0 0.0
        %1257 = vmatpush.msra.mxu0 0.0
        %1258 = vmatpush.msra.mxu0 0.0
        %1259 = vmatpush.msra.mxu0 0.0
        %1260 = vmatpush.msra.mxu0 0.0
        %1261 = vmatpush.msra.mxu0 0.0
        %1262 = vmatpush.msra.mxu0 0.0
        %1263 = vmatpush.msra.mxu0 0.0
        %1264 = vmatpush.msra.mxu0 0.0
        %1265 = vmatpush.msra.mxu0 %v1236
        %1266 = vmatpush.msra.mxu0 %v1235
        %1267 = vmatpush.msra.mxu0 %v1234
        %1268 = vmatpush.msra.mxu0 %v1233
        %1269 = vmatmul.f32.gmra.mxu0 %v1242
        %v1270 = vpop.f32.mrf.mxu0
        %v1271 = vadd.f32 %v1239, %v1270
        %1272 = vmatmul.f32.gmra.mxu0 %v1245
        %v1273 = vpop.f32.mrf.mxu0
        %v1274 = vadd.f32 %v1239, %v1273
        %1275 = vmatmul.f32.gmra.mxu0 %v1248
        %v1276 = vpop.f32.mrf.mxu0
        %v1277 = vadd.f32 %v1239, %v1276
        %1278 = vmatmul.f32.gmra.mxu0 %v1251
        %v1279 = vpop.f32.mrf.mxu0
        %v1280 = vadd.f32 %v1239, %v1279
        %1281 = vdwg.mxu0
        %v1282 = vadd.f32 %v821, %v1271
        %v1283 = vadd.f32 %v822, %v1274
        %v1284 = vadd.f32 %v823, %v1277
        %v1285 = vadd.f32 %v824, %v1280
        %v1286 = vsel %vm841, %v1282, 0.0
        %1287 = vadd.xlane.f32.xlu0 %v1286
        %v1288 = vpop.xlane.xlu0 %1287
        %v1289 = vsel %vm841, %v1283, 0.0
        %1290 = vadd.xlane.f32.xlu0 %v1289
        %v1291 = vpop.xlane.xlu0 %1290
        %v1292 = vsel %vm841, %v1284, 0.0
        %1293 = vadd.xlane.f32.xlu0 %v1292
        %v1294 = vpop.xlane.xlu0 %1293
        %v1295 = vsel %vm841, %v1285, 0.0
        %1296 = vadd.xlane.f32.xlu0 %v1295
        %v1297 = vpop.xlane.xlu0 %1296
        %v1298 = vrcp.pop 32.0
        %v1299 = vmul.f32 32.0, %v1298
        %v1300 = vsub.f32 1.0, %v1299
        %v1301 = vmul.f32 %v1298, %v1300
        %v1302 = vadd.f32 %v1298, %v1301
        %vm1303 = vweird.f32 %v1298
        %v1304 = vsel %vm1303, %v1298, %v1302
        %v1305 = vmul.f32 %v1288, %v1304
        %v1306 = vmul.f32 %v1291, %v1304
        %v1307 = vmul.f32 %v1294, %v1304
        %v1308 = vmul.f32 %v1297, %v1304
        %v1309 = vsub.f32 %v1282, %v1305
        %v1310 = vsub.f32 %v1283, %v1306
        %v1311 = vsub.f32 %v1284, %v1307
        %v1312 = vsub.f32 %v1285, %v1308
        %v1313 = vmul.f32 %v1309, %v1309
        %v1314 = vmul.f32 %v1310, %v1310
        %v1315 = vmul.f32 %v1311, %v1311
        %v1316 = vmul.f32 %v1312, %v1312
        %v1317 = vsel %vm841, %v1313, 0.0
        %1318 = vadd.xlane.f32.xlu0 %v1317
        %v1319 = vpop.xlane.xlu0 %1318
        %v1320 = vsel %vm841, %v1314, 0.0
        %1321 = vadd.xlane.f32.xlu0 %v1320
        %v1322 = vpop.xlane.xlu0 %1321
        %v1323 = vsel %vm841, %v1315, 0.0
        %1324 = vadd.xlane.f32.xlu0 %v1323
        %v1325 = vpop.xlane.xlu0 %1324
        %v1326 = vsel %vm841, %v1316, 0.0
        %1327 = vadd.xlane.f32.xlu0 %v1326
        %v1328 = vpop.xlane.xlu0 %1327
        %v1329 = vmul.f32 %v1319, %v1304
        %v1330 = vmul.f32 %v1322, %v1304
        %v1331 = vmul.f32 %v1325, %v1304
        %v1332 = vmul.f32 %v1328, %v1304
        %v1333 = vadd.f32 %v1329, 1e-05
        %v1334 = vadd.f32 %v1330, 1e-05
        %v1335 = vadd.f32 %v1331, 1e-05
        %v1336 = vadd.f32 %v1332, 1e-05
        %v1337 = vrsqrt.pop %v1333
        %v1338 = vmul.f32 %v1337, %v1333
        %v1339 = vmul.f32 %v1338, %v1337
        %v1340 = vmul.f32 0.5, %v1339
        %v1341 = vsub.f32 1.5, %v1340
        %v1342 = vmul.f32 %v1337, %v1341
        %vm1343 = vweird.f32 %v1333
        %vm1344 = vweird.f32 %v1337
        %vm1345 = vmor %vm1343, %vm1344
        %v1346 = vsel %vm1345, %v1337, %v1342
        %v1347 = vrsqrt.pop %v1334
        %v1348 = vmul.f32 %v1347, %v1334
        %v1349 = vmul.f32 %v1348, %v1347
        %v1350 = vmul.f32 0.5, %v1349
        %v1351 = vsub.f32 1.5, %v1350
        %v1352 = vmul.f32 %v1347, %v1351
        %vm1353 = vweird.f32 %v1334
        %vm1354 = vweird.f32 %v1347
        %vm1355 = vmor %vm1353, %vm1354
        %v1356 = vsel %vm1355, %v1347, %v1352
        %v1357 = vrsqrt.pop %v1335
        %v1358 = vmul.f32 %v1357, %v1335
        %v1359 = vmul.f32 %v1358, %v1357
        %v1360 = vmul.f32 0.5, %v1359
        %v1361 = vsub.f32 1.5, %v1360
        %v1362 = vmul.f32 %v1357, %v1361
        %vm1363 = vweird.f32 %v1335
        %vm1364 = vweird.f32 %v1357
        %vm1365 = vmor %vm1363, %vm1364
        %v1366 = vsel %vm1365, %v1357, %v1362
        %v1367 = vrsqrt.pop %v1336
        %v1368 = vmul.f32 %v1367, %v1336
        %v1369 = vmul.f32 %v1368, %v1367
        %v1370 = vmul.f32 0.5, %v1369
        %v1371 = vsub.f32 1.5, %v1370
        %v1372 = vmul.f32 %v1367, %v1371
        %vm1373 = vweird.f32 %v1336
        %vm1374 = vweird.f32 %v1367
        %vm1375 = vmor %vm1373, %vm1374
        %v1376 = vsel %vm1375, %v1367, %v1372
        %v1377 = vmul.f32 %v1309, %v1346
        %v1378 = vmul.f32 %v1310, %v1356
        %v1379 = vmul.f32 %v1311, %v1366
        %v1380 = vmul.f32 %v1312, %v1376
        %v1381 = vld [vmem:[%s8] sm:$0x1]
        %v1383 = vperm.slane %v1381, 0
        %v1385 = vmul.f32 %v1377, %v1383
        %v1386 = vmul.f32 %v1378, %v1383
        %v1387 = vmul.f32 %v1379, %v1383
        %v1388 = vmul.f32 %v1380, %v1383
        %v1389 = vld [vmem:[%s9] sm:$0x1]
        %v1391 = vperm.slane %v1389, 0
        %v1393 = vadd.f32 %v1385, %v1391
        %v1394 = vadd.f32 %v1386, %v1391
        %v1395 = vadd.f32 %v1387, %v1391
        %v1396 = vadd.f32 %v1388, %v1391
        %1397 = vst.msk [vmem:[#allocation2] sm:$0xff] %vm841, %v1393
        %1398 = vst.msk [vmem:[#allocation2 + $0x8] sm:$0xff] %vm841, %v1394
        %1399 = vst.msk [vmem:[#allocation2 + $0x10] sm:$0xff] %vm841, %v1395
        %1400 = vst.msk [vmem:[#allocation2 + $0x18] sm:$0xff] %vm841, %v1396
        %v1401 = vld [vmem:[#allocation2] ss:$4 sm:$0xff]
        %s1402 = scalar_lea.vmem [#allocation2], 1
        %v1403 = vld [vmem:[%s1402] ss:$4 sm:$0xff]
        %s1404 = scalar_lea.vmem [#allocation2], 2
        %v1405 = vld [vmem:[%s1404] ss:$4 sm:$0xff]
        %s1406 = scalar_lea.vmem [#allocation2], 3
        %v1407 = vld [vmem:[%s1406] ss:$4 sm:$0xff]
        %1409 = vrot.lane.b32.xlu0 %v1403, 32
        %v1410 = vpop.permute.xlu0 %1409
        %1413 = vrot.lane.b32.xlu0 %v1405, 64
        %v1414 = vpop.permute.xlu0 %1413
        %1417 = vrot.lane.b32.xlu0 %v1407, 96
        %v1418 = vpop.permute.xlu0 %1417
        %v1420 = vsel %vm841, %v1401, %v1410
        %vm1421 = vcmask 523264
        %v1422 = vsel %vm1421, %v1420, %v1414
        %vm1423 = vcmask 785408
        %v1424 = vsel %vm1423, %v1422, %v1418
        %v1425 = vld [vmem:[#allocation14] sm:$0xff]
        %v1426 = vld [vmem:[#allocation14 + $0x8] sm:$0xff]
        %v1427 = vld [vmem:[#allocation14 + $0x10] sm:$0xff]
        %v1428 = vld [vmem:[#allocation14 + $0x18] sm:$0xff]
        %v1429 = vld [vmem:[#allocation14 + $0x20] sm:$0xff]
        %v1430 = vld [vmem:[#allocation14 + $0x28] sm:$0xff]
        %v1431 = vld [vmem:[#allocation14 + $0x30] sm:$0xff]
        %v1432 = vld [vmem:[#allocation14 + $0x38] sm:$0xff]
        %v1433 = vld [vmem:[#allocation14 + $0x40] sm:$0xff]
        %v1434 = vld [vmem:[#allocation14 + $0x48] sm:$0xff]
        %v1435 = vld [vmem:[#allocation14 + $0x50] sm:$0xff]
        %v1436 = vld [vmem:[#allocation14 + $0x58] sm:$0xff]
        %v1437 = vld [vmem:[#allocation14 + $0x60] sm:$0xff]
        %v1438 = vld [vmem:[#allocation14 + $0x68] sm:$0xff]
        %v1439 = vld [vmem:[#allocation14 + $0x70] sm:$0xff]
        %v1440 = vld [vmem:[#allocation14 + $0x78] sm:$0xff]
        %v1441 = vld [vmem:[%s12] sm:$0x1]
        %v1443 = vperm.slane %v1441, 0
        %1445 = vmatpush.msra.mxu0 %v1440
        %1446 = vmatpush.msra.mxu0 %v1439
        %1447 = vmatpush.msra.mxu0 %v1438
        %1448 = vmatpush.msra.mxu0 %v1437
        %1449 = vmatpush.msra.mxu0 %v1436
        %1450 = vmatpush.msra.mxu0 %v1435
        %1451 = vmatpush.msra.mxu0 %v1434
        %1452 = vmatpush.msra.mxu0 %v1433
        %1453 = vmatpush.msra.mxu0 %v1432
        %1454 = vmatpush.msra.mxu0 %v1431
        %1455 = vmatpush.msra.mxu0 %v1430
        %1456 = vmatpush.msra.mxu0 %v1429
        %1457 = vmatpush.msra.mxu0 %v1428
        %1458 = vmatpush.msra.mxu0 %v1427
        %1459 = vmatpush.msra.mxu0 %v1426
        %1460 = vmatpush.msra.mxu0 %v1425
        %1461 = vmatmul.f32.gmra.mxu0 %v1424
        %v1462 = vpop.f32.mrf.mxu0
        %v1463 = vadd.f32 %v1443, %v1462
        %1464 = vdwg.mxu0
        %v1465 = vmul.f32 %v1463, 0.5
        %v1466 = vmul.f32 %v1463, 0.70710677
        %vm1467 = vcmp.ge.f32.partialorder %v1466, 0.0
        %v1468 = vsel %vm1467, 1.0, -1.0
        %v1469 = vand.u32 2147483647, %v1466
        %v1470 = vmul.f32 %v1469, 0.3275911
        %v1471 = vadd.f32 %v1470, 1.0
        %v1472 = vrcp.pop %v1471
        %v1473 = vmul.f32 %v1471, %v1472
        %v1474 = vsub.f32 1.0, %v1473
        %v1475 = vmul.f32 %v1472, %v1474
        %v1476 = vadd.f32 %v1472, %v1475
        %vm1477 = vweird.f32 %v1471
        %vm1478 = vweird.f32 %v1472
        %vm1479 = vmor %vm1477, %vm1478
        %v1480 = vsel %vm1479, %v1472, %v1476
        %v1481 = vand.u32 2147483647, %v1471
        %vm1482 = vcmp.eq.f32.partialorder %v1481, 8.507059e+37
        %v1483 = vand.u32 %v1471, 2147483648
        %v1484 = vor.u32 1.1754944e-38, %v1483
        %v1485 = vsel %vm1482, %v1484, %v1480
        %v1486 = vmul.f32 1.0, %v1485
        %v1487 = vmul.f32 %v1486, 1.0614054
        %v1488 = vadd.f32 %v1487, -1.4531521
        %v1489 = vmul.f32 %v1486, %v1488
        %v1490 = vadd.f32 %v1489, 1.4214138
        %v1491 = vmul.f32 %v1486, %v1490
        %v1492 = vadd.f32 %v1491, -0.28449672
        %v1493 = vmul.f32 %v1486, %v1492
        %v1494 = vadd.f32 %v1493, 0.2548296
        %v1495 = vmul.f32 %v1486, %v1494
        %v1496 = vsub.f32 0.0, %v1469
        %v1497 = vmul.f32 %v1496, %v1469
        %v1498 = vmul.f32 %v1497, 1.442695
        %v1499 = vpow.pop %v1498
        %v1500 = vmul.f32 %v1495, %v1499
        %v1501 = vsub.f32 1.0, %v1500
        %v1502 = vmul.f32 %v1468, %v1501
        %v1503 = vadd.f32 %v1502, 1.0
        %v1504 = vmul.f32 %v1465, %v1503
        %v1505 = vld [vmem:[#allocation15] sm:$0xff]
        %v1506 = vld [vmem:[#allocation15 + $0x8] sm:$0xff]
        %v1507 = vld [vmem:[#allocation15 + $0x10] sm:$0xff]
        %v1508 = vld [vmem:[#allocation15 + $0x18] sm:$0xff]
        %v1509 = vld [vmem:[#allocation15 + $0x20] sm:$0xff]
        %v1510 = vld [vmem:[#allocation15 + $0x28] sm:$0xff]
        %v1511 = vld [vmem:[#allocation15 + $0x30] sm:$0xff]
        %v1512 = vld [vmem:[#allocation15 + $0x38] sm:$0xff]
        %v1513 = vld [vmem:[#allocation15 + $0x40] sm:$0xff]
        %v1514 = vld [vmem:[#allocation15 + $0x48] sm:$0xff]
        %v1515 = vld [vmem:[#allocation15 + $0x50] sm:$0xff]
        %v1516 = vld [vmem:[#allocation15 + $0x58] sm:$0xff]
        %v1517 = vld [vmem:[#allocation15 + $0x60] sm:$0xff]
        %v1518 = vld [vmem:[#allocation15 + $0x68] sm:$0xff]
        %v1519 = vld [vmem:[#allocation15 + $0x70] sm:$0xff]
        %v1520 = vld [vmem:[#allocation15 + $0x78] sm:$0xff]
        %v1521 = vld [vmem:[%s14] sm:$0x1]
        %v1523 = vperm.slane %v1521, 0
        %1525 = vmatpush.msra.mxu0 %v1520
        %1526 = vmatpush.msra.mxu0 %v1519
        %1527 = vmatpush.msra.mxu0 %v1518
        %1528 = vmatpush.msra.mxu0 %v1517
        %1529 = vmatpush.msra.mxu0 %v1516
        %1530 = vmatpush.msra.mxu0 %v1515
        %1531 = vmatpush.msra.mxu0 %v1514
        %1532 = vmatpush.msra.mxu0 %v1513
        %1533 = vmatpush.msra.mxu0 %v1512
        %1534 = vmatpush.msra.mxu0 %v1511
        %1535 = vmatpush.msra.mxu0 %v1510
        %1536 = vmatpush.msra.mxu0 %v1509
        %1537 = vmatpush.msra.mxu0 %v1508
        %1538 = vmatpush.msra.mxu0 %v1507
        %1539 = vmatpush.msra.mxu0 %v1506
        %1540 = vmatpush.msra.mxu0 %v1505
        %1541 = vmatmul.f32.gmra.mxu0 %v1504
        %v1542 = vpop.f32.mrf.mxu0
        %v1543 = vadd.f32 %v1523, %v1542
        %1544 = vdwg.mxu0
        %v1545 = vadd.f32 %v1424, %v1543
        %v1546 = vld [vmem:[#allocation12] sm:$0xff]
        %v1547 = vld [vmem:[#allocation12 + $0x8] sm:$0xff]
        %v1548 = vld [vmem:[#allocation12 + $0x10] sm:$0xff]
        %v1549 = vld [vmem:[#allocation12 + $0x18] sm:$0xff]
        %v1550 = vld [vmem:[#allocation12 + $0x20] sm:$0xff]
        %v1551 = vld [vmem:[#allocation12 + $0x28] sm:$0xff]
        %v1552 = vld [vmem:[#allocation12 + $0x30] sm:$0xff]
        %v1553 = vld [vmem:[#allocation12 + $0x38] sm:$0xff]
        %v1554 = vld [vmem:[#allocation12 + $0x40] sm:$0xff]
        %v1555 = vld [vmem:[#allocation12 + $0x48] sm:$0xff]
        %v1556 = vld [vmem:[#allocation12 + $0x50] sm:$0xff]
        %v1557 = vld [vmem:[#allocation12 + $0x58] sm:$0xff]
        %v1558 = vld [vmem:[#allocation12 + $0x60] sm:$0xff]
        %v1559 = vld [vmem:[#allocation12 + $0x68] sm:$0xff]
        %v1560 = vld [vmem:[#allocation12 + $0x70] sm:$0xff]
        %v1561 = vld [vmem:[#allocation12 + $0x78] sm:$0xff]
        %1562 = vmatpush.msra.mxu0 %v1561
        %1563 = vmatpush.msra.mxu0 %v1560
        %1564 = vmatpush.msra.mxu0 %v1559
        %1565 = vmatpush.msra.mxu0 %v1558
        %1566 = vmatpush.msra.mxu0 %v1557
        %1567 = vmatpush.msra.mxu0 %v1556
        %1568 = vmatpush.msra.mxu0 %v1555
        %1569 = vmatpush.msra.mxu0 %v1554
        %1570 = vmatpush.msra.mxu0 %v1553
        %1571 = vmatpush.msra.mxu0 %v1552
        %1572 = vmatpush.msra.mxu0 %v1551
        %1573 = vmatpush.msra.mxu0 %v1550
        %1574 = vmatpush.msra.mxu0 %v1549
        %1575 = vmatpush.msra.mxu0 %v1548
        %1576 = vmatpush.msra.mxu0 %v1547
        %1577 = vmatpush.msra.mxu0 %v1546
        %1578 = vmatmul.f32.gmra.mxu0 %v1545
        %v1579 = vpop.f32.mrf.mxu0
        %v1580 = vadd.f32 0.0, %v1579
        %1581 = vdwg.mxu0
        %v1582 = vsub.f32 %v1545, %v1580
        %v1583 = vmul.f32 %v1582, %v1582
        %1584 = vmatpush.msra.mxu0 %v1561
        %1585 = vmatpush.msra.mxu0 %v1560
        %1586 = vmatpush.msra.mxu0 %v1559
        %1587 = vmatpush.msra.mxu0 %v1558
        %1588 = vmatpush.msra.mxu0 %v1557
        %1589 = vmatpush.msra.mxu0 %v1556
        %1590 = vmatpush.msra.mxu0 %v1555
        %1591 = vmatpush.msra.mxu0 %v1554
        %1592 = vmatpush.msra.mxu0 %v1553
        %1593 = vmatpush.msra.mxu0 %v1552
        %1594 = vmatpush.msra.mxu0 %v1551
        %1595 = vmatpush.msra.mxu0 %v1550
        %1596 = vmatpush.msra.mxu0 %v1549
        %1597 = vmatpush.msra.mxu0 %v1548
        %1598 = vmatpush.msra.mxu0 %v1547
        %1599 = vmatpush.msra.mxu0 %v1546
        %1600 = vmatmul.f32.gmra.mxu0 %v1583
        %v1601 = vpop.f32.mrf.mxu0
        %v1602 = vadd.f32 1e-05, %v1601
        %1603 = vdwg.mxu0
        %v1604 = vrsqrt.pop %v1602
        %v1605 = vmul.f32 %v1604, %v1602
        %v1606 = vmul.f32 %v1605, %v1604
        %v1607 = vmul.f32 0.5, %v1606
        %v1608 = vsub.f32 1.5, %v1607
        %v1609 = vmul.f32 %v1604, %v1608
        %vm1610 = vweird.f32 %v1602
        %vm1611 = vweird.f32 %v1604
        %vm1612 = vmor %vm1610, %vm1611
        %v1613 = vsel %vm1612, %v1604, %v1609
        %v1614 = vmul.f32 %v1582, %v1613
        %v1615 = vld [vmem:[%s15] sm:$0x1]
        %v1617 = vperm.slane %v1615, 0
        %v1619 = vmul.f32 %v1614, %v1617
        %v1620 = vld [vmem:[%s16] sm:$0x1]
        %v1622 = vperm.slane %v1620, 0
        %v1624 = vadd.f32 %v1619, %v1622
        %1625 = vst [vmem:[%s811] sm:$0xff] %v1624
        %v1626 = vld [vmem:[#allocation17] sm:$0xff]
        %v1627 = vld [vmem:[#allocation17 + $0x8] sm:$0xff]
        %v1628 = vld [vmem:[#allocation17 + $0x10] sm:$0xff]
        %v1629 = vld [vmem:[#allocation17 + $0x18] sm:$0xff]
        %v1630 = vld [vmem:[#allocation17 + $0x20] sm:$0xff]
        %v1631 = vld [vmem:[#allocation17 + $0x28] sm:$0xff]
        %v1632 = vld [vmem:[#allocation17 + $0x30] sm:$0xff]
        %v1633 = vld [vmem:[#allocation17 + $0x38] sm:$0xff]
        %v1634 = vld [vmem:[#allocation17 + $0x40] sm:$0xff]
        %v1635 = vld [vmem:[#allocation17 + $0x48] sm:$0xff]
        %v1636 = vld [vmem:[#allocation17 + $0x50] sm:$0xff]
        %v1637 = vld [vmem:[#allocation17 + $0x58] sm:$0xff]
        %v1638 = vld [vmem:[#allocation17 + $0x60] sm:$0xff]
        %v1639 = vld [vmem:[#allocation17 + $0x68] sm:$0xff]
        %v1640 = vld [vmem:[#allocation17 + $0x70] sm:$0xff]
        %v1641 = vld [vmem:[#allocation17 + $0x78] sm:$0xff]
        %v1642 = vld [vmem:[%s18] sm:$0x1]
        %v1644 = vperm.slane %v1642, 0
        %1646 = vmatpush.msra.mxu0 %v1641
        %1647 = vmatpush.msra.mxu0 %v1640
        %1648 = vmatpush.msra.mxu0 %v1639
        %1649 = vmatpush.msra.mxu0 %v1638
        %1650 = vmatpush.msra.mxu0 %v1637
        %1651 = vmatpush.msra.mxu0 %v1636
        %1652 = vmatpush.msra.mxu0 %v1635
        %1653 = vmatpush.msra.mxu0 %v1634
        %1654 = vmatpush.msra.mxu0 %v1633
        %1655 = vmatpush.msra.mxu0 %v1632
        %1656 = vmatpush.msra.mxu0 %v1631
        %1657 = vmatpush.msra.mxu0 %v1630
        %1658 = vmatpush.msra.mxu0 %v1629
        %1659 = vmatpush.msra.mxu0 %v1628
        %1660 = vmatpush.msra.mxu0 %v1627
        %1661 = vmatpush.msra.mxu0 %v1626
        %1662 = vmatmul.f32.gmra.mxu0 %v1624
        %v1663 = vpop.f32.mrf.mxu0
        %v1664 = vadd.f32 %v1644, %v1663
        %1665 = vdwg.mxu0
        %1666 = vst [vmem:[%s818] sm:$0xff] %v1664
        %s1667 = sand.u32 %s464, 1
        %s1668 = scalar_lea.sflag [#allocation5], %s1667
        %s1669 = sand.u32 %s464, 1
        %s1670 = smul.addr %s1669, 8
        %s1671 = scalar_lea.vmem [#allocation18], %s1670
        %s1672 = sand.u32 %s490, 1
        %s1673 = scalar_lea.sflag [#allocation20], %s1672
        %s1674 = sand.u32 %s490, 1
        %s1675 = smul.addr %s1674, 8
        %s1676 = scalar_lea.vmem [#allocation19], %s1675
        // Predicated region
        $region133: #{tpu_custom_call.1} parent=95 // pred_check
          %p1677 = pneg %p474
        $region134: #{tpu_custom_call.1} parent=95 // pred_check_branch
          %1679 = sbr.rel (%p1677) target = $region136
        $region135: #{tpu_custom_call.1} parent=95 // pred_region
          %1681 = vsyncadd %s1668, 0
          %s1682 = smul.addr %s47, 8
          %s1683 = scalar_lea.hbm %s19, %s1682
          %s1685 = sshll.u32 %s1671, 4
          %s1686 = int_to_ptr.vmem [resolvable:$true] %s1685
          %s1687 = sshll.u32 %s1683, 4
          %s1688 = int_to_ptr.hbm [resolvable:$true] %s1687
          %1690 = dma.vmem_to_hbm [thread:$0]  %s1686, 128, %s1688, %s1668
        $region136: #{tpu_custom_call.1} parent=95 // pred_fallthru
          _
        // Predicated region
        $region137: #{tpu_custom_call.1} parent=95 // pred_check
          %p1691 = pneg %p500
        $region138: #{tpu_custom_call.1} parent=95 // pred_check_branch
          %1693 = sbr.rel (%p1691) target = $region140
        $region139: #{tpu_custom_call.1} parent=95 // pred_region
          %1695 = vsyncadd %s1673, 0
          %s1696 = smul.addr %s47, 8
          %s1697 = scalar_lea.hbm %s20, %s1696
          %s1699 = sshll.u32 %s1676, 4
          %s1700 = int_to_ptr.vmem [resolvable:$true] %s1699
          %s1701 = sshll.u32 %s1697, 4
          %s1702 = int_to_ptr.hbm [resolvable:$true] %s1701
          %1704 = dma.vmem_to_hbm [thread:$0]  %s1700, 128, %s1702, %s1673
        $region140: #{tpu_custom_call.1} parent=95 // pred_fallthru
          _
      $region96: #{tpu_custom_call.1} parent=5 // pred_fallthru
        _
      %p1705 = scmp.le.s32.totalorder 2, %s42
      // Predicated region
      $region141: #{tpu_custom_call.1} parent=5 // pred_check
        %p1706 = pneg %p1705
      $region142: #{tpu_custom_call.1} parent=5 // pred_check_branch
        %1708 = sbr.rel (%p1706) target = $region144
      $region143: #{tpu_custom_call.1} parent=5 // pred_region
        %s1709 = ssub.s32 %s42, 2
        // Predicated region
        $region145: #{tpu_custom_call.1} parent=143 // pred_check
          %p1710 = pneg %p480
        $region146: #{tpu_custom_call.1} parent=143 // pred_check_branch
          %1712 = sbr.rel (%p1710) target = $region148
        $region147: #{tpu_custom_call.1} parent=143 // pred_region
          %s1713 = sand.u32 %s465, 1
          %s1714 = scalar_lea.sflag [#allocation5], %s1713
          %s1715 = sand.u32 %s465, 1
          %s1716 = smul.addr %s1715, 8
          %s1717 = scalar_lea.vmem [#allocation18], %s1716
          %1719 = dma.done %s1714, 128
        $region148: #{tpu_custom_call.1} parent=143 // pred_fallthru
          _
        // Predicated region
        $region149: #{tpu_custom_call.1} parent=143 // pred_check
          %p1720 = pneg %p506
        $region150: #{tpu_custom_call.1} parent=143 // pred_check_branch
          %1722 = sbr.rel (%p1720) target = $region152
        $region151: #{tpu_custom_call.1} parent=143 // pred_region
          %s1723 = sand.u32 %s491, 1
          %s1724 = scalar_lea.sflag [#allocation20], %s1723
          %s1725 = sand.u32 %s491, 1
          %s1726 = smul.addr %s1725, 8
          %s1727 = scalar_lea.vmem [#allocation19], %s1726
          %1729 = dma.done %s1724, 128
        $region152: #{tpu_custom_call.1} parent=143 // pred_fallthru
          _
      $region144: #{tpu_custom_call.1} parent=5 // pred_fallthru
        _
    $region6: #{tpu_custom_call.1} parent=1 // loop_footer
      %s46 = sadd.s32 1, %s42
    $region7: #{tpu_custom_call.1} parent=1 // loop_footer_branch
      %41 = sbr.rel target = $region3
    $region8: #{tpu_custom_call.1} parent=1 // loop_exit
      _
    %1730 = vsyncpa [#allocation4], 1
    %s1731 = scalar_lea.sflag [#allocation4], 1
    %1732 = vsyncpa %s1731, 1
    %1733 = vsyncpa [#allocation7], 1
    %s1734 = scalar_lea.sflag [#allocation7], 1
    %1735 = vsyncpa %s1734, 1
    %1736 = vsyncpa [#allocation10], 1
    %1737 = vsyncpa [#allocation13], 1
    %1738 = vsyncpa [#allocation16], 1
    %1739 = vsyncpa [#allocation5], 1
    %s1740 = scalar_lea.sflag [#allocation5], 1
    %1741 = vsyncpa %s1740, 1
    %1742 = vsyncpa [#allocation20], 1
    %s1743 = scalar_lea.sflag [#allocation20], 1
    %1744 = vsyncpa %s1743, 1

</llo_original>
